<compile_context>
chip_gen: v6e
topology: v6e:2x2x1
jax: 0.10.0
libtpu: 0.0.40
codegen_flags: <defaults>
</compile_context>

<pallas_src>
import functools

import jax
import jax.numpy as jnp
from jax import lax
from jax.experimental import pallas as pl
from jax.experimental.pallas import tpu as pltpu

EPS = 0.01
GAMMA = 1.0          # unused in forward math, kept for parity with __init__
COMPRESS_ONLY = False


def _round_up(x, n):
    return (x + n - 1) // n * n


def _eye(p, dtype=jnp.float32):
    row = lax.broadcasted_iota(jnp.int32, (p, p), 0)
    col = lax.broadcasted_iota(jnp.int32, (p, p), 1)
    return (row == col).astype(dtype)


def _choose_kc(K, p, acc_budget_bytes=8 << 20):
    """Classes per grid block (kc) and padded class count."""
    cap = max(1, acc_budget_bytes // (p * p * 4))
    if K <= cap:
        return K, K                          # single group: block dim == full dim
    kc = max(8, min(cap, 64) // 8 * 8)       # multiple of 8 -> legal Pi sublane tile
    return kc, _round_up(K, kc)


def _choose_tk(m, p, kc, budget_bytes=16 << 20, max_tk=8192):
    """m-reduction tile (multiple of 128) within a VMEM byte budget."""
    per_tk = 2 * 2 * p + 2 * 2 * kc + 2 * kc * p   # W(x2 buf), Pi(x2 buf), masked LHS
    tk_cap = max(128, budget_bytes // per_tk // 128 * 128)
    return max(128, min(max_tk, tk_cap, _round_up(m, 128)))


# ---------------------------------------------------------------------------
# Fused Gram kernel.  grid = (class_group g, m_tile j); j = reduction (last).
#   out[c] accumulates I + sum_j (W_j * Pi[c]_j) @ W_j^T   (scales pre-folded
#   into Pi, discriminative term is just another class row).
# ---------------------------------------------------------------------------
def _mcr2_gram_kernel(w_ref, pi_ref, a_ref, *, kc, p):
    j = pl.program_id(1)

    @pl.when(j == 0)
    def _():                                    # (re)start accumulation: A <- I
        a_ref[...] = jnp.broadcast_to(_eye(p)[None], (kc, p, p))

    w = w_ref[...]                              # (p, tk)  bf16
    pi = pi_ref[...]                            # (kc, tk) bf16, scale pre-folded
    # Stack all kc masked copies of W along MXU rows: (kc*p, tk) contract tk.
    lhs = (pi[:, None, :] * w[None, :, :]).reshape(kc * p, w.shape[1])
    gram = lax.dot_general(lhs, w, (((1,), (1,)), ((), ())),
                           preferred_element_type=jnp.float32)   # (kc*p, p) f32
    a_ref[...] += gram.reshape(kc, p, p)


def mcr2_grams(W_bf, Pi_bf, *, kc, ng, tk, p):
    """W_bf: (p, m_pad), Pi_bf: (ng*kc, m_pad) with scales folded in (both bf16)
       -> A: (ng*kc, p, p) f32, A[c] = I + (W * Pi[c]) @ W^T."""
    m_pad = W_bf.shape[1]
    nj = m_pad // tk
    K_pad = ng * kc

    vmem_needed = (2 * (p * tk * 2) + 2 * (kc * tk * 2) + 2 * (kc * p * p * 4)
                   + kc * p * tk * 2 + kc * p * p * 4 + (2 << 20))
    vmem_limit = int(min(max(vmem_needed, 16 << 20), 60 << 20))

    kernel = functools.partial(_mcr2_gram_kernel, kc=kc, p=p)
    return pl.pallas_call(
        kernel,
        out_shape=jax.ShapeDtypeStruct((K_pad, p, p), jnp.float32),
        grid_spec=pltpu.PrefetchScalarGridSpec(
            num_scalar_prefetch=0,
            grid=(ng, nj),                                       # classes outer, m last
            in_specs=[
                pl.BlockSpec((p, tk), lambda g, j: (0, j)),      # W: once per group
                pl.BlockSpec((kc, tk), lambda g, j: (g, j)),     # Pi group tile
            ],
            out_specs=pl.BlockSpec((kc, p, p), lambda g, j: (g, 0, 0)),
        ),
        compiler_params=pltpu.CompilerParams(
            dimension_semantics=("parallel", "arbitrary"),       # megacore on v7x
            vmem_limit_bytes=vmem_limit),
    )(W_bf, Pi_bf)


# ---------------------------------------------------------------------------
# Cholesky-based logdet (every A is SPD: I + positive-scale * PSD).
# ---------------------------------------------------------------------------
def _chol_logdet(A):
    L = jnp.linalg.cholesky(A)
    diag = jnp.diagonal(L, axis1=-2, axis2=-1)
    return 2.0 * jnp.sum(jnp.log(diag), axis=-1)


# ---------------------------------------------------------------------------
# Forward pass (MaximalCodingRateReduction.forward semantics).
# ---------------------------------------------------------------------------
def mcr2_forward(X, Y, num_classes=None, eps=EPS, compress_only=COMPRESS_ONLY,
                 mxu_dtype=jnp.bfloat16):
    """X: (m, p) float features; Y: (m,) int labels or (m, k) soft memberships.
    Pass num_classes explicitly for integer labels so the function is jittable.
    Set mxu_dtype=jnp.float32 if tighter parity with the f32 reference is needed."""
    X = X.astype(jnp.float32)
    m, p = X.shape

    if Y.ndim == 1:
        if num_classes is None:
            num_classes = int(Y.max()) + 1      # NOTE: host sync; breaks jit
        Pi = jax.nn.one_hot(Y, num_classes, dtype=jnp.float32).T        # (k, m)
    else:
        if num_classes is None:
            num_classes = Y.shape[1]
        Pi = Y.T.reshape(num_classes, m).astype(jnp.float32)            # (k, m)
    k = int(num_classes)

    trPi = Pi.sum(axis=1) + 1e-8                                        # (k,)
    scale_k = p / (trPi * eps)                                          # (k,)

    # Discriminative Gram as pseudo-class k: Pi row of ones, scale = p/(m*eps).
    pi_aug = jnp.concatenate([Pi, jnp.ones((1, m), jnp.float32)], axis=0)
    scale_aug = jnp.concatenate(
        [scale_k, jnp.full((1,), p / (m * eps), jnp.float32)])
    K = k + 1

    kc, K_pad = _choose_kc(K, p)
    ng = K_pad // kc
    tk = _choose_tk(m, p, kc)
    m_pad = _round_up(m, tk)

    # Pre-fold scales into Pi; zero-pad classes & samples (zero cols/rows do not
    # change the Grams); ship both operands in the MXU dtype (bf16 by default).
    pi_scaled = pi_aug * scale_aug[:, None]
    pi_scaled = jnp.pad(pi_scaled, ((0, K_pad - K), (0, m_pad - m)))
    W = jnp.pad(X.T, ((0, 0), (0, m_pad - m)))                          # (p, m_pad)

    A = mcr2_grams(W.astype(mxu_dtype), pi_scaled.astype(mxu_dtype),
                   kc=kc, ng=ng, tk=tk, p=p)                            # (K_pad, p, p)

    log_det = _chol_logdet(A[:K])                                       # (K,)
    compress_loss = jnp.sum(trPi * log_det[:k] / (2.0 * m))
    if compress_only:
        return None, compress_loss
    discrimn_loss = log_det[k] / 2.0
    return discrimn_loss, compress_loss


if __name__ == "__main__":
    key = jax.random.PRNGKey(0)
    kx, ky = jax.random.split(key)

    m, p, k = 64, 32, 4                       # samples, feature dim, classes
    X = jax.random.normal(kx, (m, p), dtype=jnp.float32)
    Y = jax.random.randint(ky, (m,), 0, k, dtype=jnp.int32)

    fwd = jax.jit(functools.partial(mcr2_forward, num_classes=k))
    discrimn_loss, compress_loss = fwd(X, Y)
    jax.block_until_ready((discrimn_loss, compress_loss))

    # --- plain-JAX f32 reference (same math as the PyTorch module) ---
    def ref_forward(X, Y, k):
        Pi = jax.nn.one_hot(Y, k, dtype=jnp.float32).T.reshape(k, 1, m)
        W = X.T
        I = jnp.eye(p, dtype=jnp.float32)
        trPi = Pi.sum(2).reshape(k) + 1e-8
        scale = (p / (trPi * EPS)).reshape(k, 1, 1)
        masked = W[None] * Pi                              # (k, p, m)
        Ak = I[None] + scale * jnp.einsum('kpm,qm->kpq', masked, W)
        compress = jnp.sum(trPi * jnp.linalg.slogdet(Ak)[1] / (2.0 * m))
        Ad = I + (p / (m * EPS)) * (W @ W.T)
        discrimn = jnp.linalg.slogdet(Ad)[1] / 2.0
        return discrimn, compress

    d_ref, c_ref = ref_forward(X, Y, k)
    d_ref, c_ref = float(d_ref), float(c_ref)

    assert bool(jnp.isfinite(discrimn_loss)) and bool(jnp.isfinite(compress_loss))
    assert abs(float(discrimn_loss) - d_ref) <= 5e-2 * abs(d_ref) + 5e-2, (
        float(discrimn_loss), d_ref)
    assert abs(float(compress_loss) - c_ref) <= 5e-2 * abs(c_ref) + 5e-2, (
        float(compress_loss), c_ref)
    print("KERNEL_OK")
</pallas_src>

<mosaic_0001>
module attributes {stable_mosaic.version = 11 : i64} {
  func.func @_mcr2_gram_kernel(%arg0: i32, %arg1: i32, %arg2: memref<32x128xbf16, #tpu.memory_space<vmem>>, %arg3: memref<5x128xbf16, #tpu.memory_space<vmem>>, %arg4: memref<5x32x32xf32, #tpu.memory_space<vmem>>) attributes {dimension_semantics = [#tpu.dimension_semantics<parallel>, #tpu.dimension_semantics<arbitrary>], iteration_bounds = array<i64: 1, 1>, scalar_prefetch = 0 : i64, scratch_operands = 0 : i64, tpu.core_type = #tpu.core_type<tc>, window_params = [{transform_indices = @transform_0, window_bounds = array<i64: 32, 128>}, {transform_indices = @transform_1, window_bounds = array<i64: 5, 128>}, {transform_indices = @transform_2, window_bounds = array<i64: 5, 32, 32>}]} {
    %c0_i32 = arith.constant 0 : i32
    %0 = arith.cmpi eq, %arg1, %c0_i32 : i32
    %1 = arith.extui %0 : i1 to i32
    %c0_i32_0 = arith.constant 0 : i32
    %2 = arith.cmpi ne, %1, %c0_i32_0 : i32
    scf.if %2 {
      %16 = tpu.iota {dimensions = array<i32: 0>} : vector<32x32xi32>
      %17 = tpu.iota {dimensions = array<i32: 1>} : vector<32x32xi32>
      %18 = arith.cmpi eq, %16, %17 : vector<32x32xi32>
      %19 = arith.extui %18 : vector<32x32xi1> to vector<32x32xi32>
      %20 = arith.sitofp %19 : vector<32x32xi32> to vector<32x32xf32>
      %21 = vector.shape_cast %20 : vector<32x32xf32> to vector<1x32x32xf32>
      %22 = vector.shape_cast %21 : vector<1x32x32xf32> to vector<1x32x32xf32>
      %23 = vector.broadcast %22 : vector<1x32x32xf32> to vector<5x32x32xf32>
      %c0_10 = arith.constant 0 : index
      %c0_11 = arith.constant 0 : index
      %c0_12 = arith.constant 0 : index
      %24 = vector.load %arg4[%c0_10, %c0_11, %c0_12] : memref<5x32x32xf32, #tpu.memory_space<vmem>>, vector<5x32x32xf32>
      tpu.vector_store %arg4[%c0_10, %c0_11, %c0_12], %23 {strides = array<i32>} : memref<5x32x32xf32, #tpu.memory_space<vmem>>, vector<5x32x32xf32>,
    } else {
    }
    %c0 = arith.constant 0 : index
    %c0_1 = arith.constant 0 : index
    %3 = vector.load %arg2[%c0, %c0_1] : memref<32x128xbf16, #tpu.memory_space<vmem>>, vector<32x128xbf16>
    %c0_2 = arith.constant 0 : index
    %c0_3 = arith.constant 0 : index
    %4 = vector.load %arg3[%c0_2, %c0_3] : memref<5x128xbf16, #tpu.memory_space<vmem>>, vector<5x128xbf16>
    %5 = vector.shape_cast %4 : vector<5x128xbf16> to vector<5x1x128xbf16>
    %6 = vector.shape_cast %3 : vector<32x128xbf16> to vector<1x32x128xbf16>
    %7 = vector.broadcast %5 : vector<5x1x128xbf16> to vector<5x32x128xbf16>
    %8 = vector.broadcast %6 : vector<1x32x128xbf16> to vector<5x32x128xbf16>
    %9 = arith.mulf %7, %8 : vector<5x32x128xbf16>
    %10 = vector.shape_cast %9 : vector<5x32x128xbf16> to vector<160x128xbf16>
    %cst = arith.constant dense<0.000000e+00> : vector<160x32xf32>
    %11 = tpu.matmul %10, %3, %cst {dimension_numbers = #tpu.dot_dimension_numbers<[1], [1], [0], [0], [0, 0, 1, 0], [], []>} : vector<160x128xbf16>, vector<32x128xbf16>, vector<160x32xf32> -> vector<160x32xf32>
    %c0_4 = arith.constant 0 : index
    %c0_5 = arith.constant 0 : index
    %c0_6 = arith.constant 0 : index
    %12 = vector.load %arg4[%c0_4, %c0_5, %c0_6] : memref<5x32x32xf32, #tpu.memory_space<vmem>>, vector<5x32x32xf32>
    %13 = vector.shape_cast %11 : vector<160x32xf32> to vector<5x32x32xf32>
    %14 = arith.addf %12, %13 : vector<5x32x32xf32>
    %c0_7 = arith.constant 0 : index
    %c0_8 = arith.constant 0 : index
    %c0_9 = arith.constant 0 : index
    %15 = vector.load %arg4[%c0_7, %c0_8, %c0_9] : memref<5x32x32xf32, #tpu.memory_space<vmem>>, vector<5x32x32xf32>
    tpu.vector_store %arg4[%c0_7, %c0_8, %c0_9], %14 {strides = array<i32>} : memref<5x32x32xf32, #tpu.memory_space<vmem>>, vector<5x32x32xf32>,
    return
  }
  func.func @transform_0(%arg0: i32, %arg1: i32) -> (i32, i32) {
    %c0_i32 = arith.constant 0 : i32
    %c0_i32_0 = arith.constant 0 : i32
    return %c0_i32, %arg1 : i32, i32
  }
  func.func @transform_1(%arg0: i32, %arg1: i32) -> (i32, i32) {
    %c0_i32 = arith.constant 0 : i32
    return %arg0, %arg1 : i32, i32
  }
  func.func @transform_2(%arg0: i32, %arg1: i32) -> (i32, i32, i32) {
    %c0_i32 = arith.constant 0 : i32
    %c0_i32_0 = arith.constant 0 : i32
    %c0_i32_1 = arith.constant 0 : i32
    return %arg0, %c0_i32, %c0_i32_0 : i32, i32, i32
  }
}

</mosaic_0001>

<llo_original>
// kernel: custom-call.2
$region0: #{custom-call.2}
  %s0 = inlined_call_operand.vmem [shape: f32[5,32,32], index: 0, kind: input, shape index: {}]
  %s1 = inlined_call_operand.vmem [shape: f32[5,32,32], index: 1, kind: output, shape index: {}]
  $region1: #{custom-call.2} parent=0
    #allocation0 [shape = 'u8[32768]{0}', space=vmem, size = 0x8000, scoped, tag = 'operand span for operand 0']
    #allocation1 [shape = 'u8[32768]{0}', space=vmem, size = 0x8000, scoped, tag = 'operand span for operand 1']
    loop: start=0, step=1, limit=7
    $region2: #{custom-call.2} parent=1 // loop_pre_header
      _
    $region3: #{custom-call.2} parent=1 // loop_header
      %s3 = sphi 0, %s7
      %p4 = scmp.ge.s32.totalorder %s3, 7
      %s10 = sphi 0, %s29
      %s11 = sphi 0, %s25
      %s12 = sphi 0, %s21
      %s13 = sphi 0, %s10
      %s14 = sphi 0, %s11
      %s15 = sphi 0, %s12
      %s16 = sphi 0, %s13
      %s17 = sphi 0, %s14
      %s18 = sphi 0, %s15
    $region4: #{custom-call.2} parent=1 // loop_header_branch
      %6 = sbr.rel (%p4) target = $region8
    $region5: #{custom-call.2} parent=1 // loop_body
      %s8 = ssub.s32 %s3, 1
      %s9 = ssub.s32 %s3, 2
      %s19 = sadd.s32 1, %s12
      %p20 = scmp.ge.s32.totalorder %s19, 1
      %s21 = scalar_select %p20, 0, %s19
      %s22 = sadd.s32 1, %s11
      %s23 = scalar_select %p20, %s22, %s11
      %p24 = scmp.ge.s32.totalorder %s23, 1
      %s25 = scalar_select %p24, 0, %s23
      %s26 = sadd.s32 1, %s10
      %s27 = scalar_select %p24, %s26, %s10
      %p28 = scmp.ge.s32.totalorder %s27, 5
      %s29 = scalar_select %p28, 0, %s27
      %p30 = scmp.le.s32.totalorder 1, %s3
      %p31 = scmp.lt.s32.totalorder %s3, 6
      %p32 = pnand %p30, %p31
      %p33 = pneg %p32
      // Predicated region
      $region9: #{custom-call.2} parent=5 // pred_check
        _
      $region10: #{custom-call.2} parent=5 // pred_check_branch
        %35 = sbr.rel (%p32) target = $region12
      $region11: #{custom-call.2} parent=5 // pred_region
        %s36 = ssub.s32 %s3, 1
      $region12: #{custom-call.2} parent=5 // pred_fallthru
        _
      %p37 = scmp.lt.s32.totalorder %s3, 5
      // Predicated region
      $region13: #{custom-call.2} parent=5 // pred_check
        %p38 = pneg %p37
      $region14: #{custom-call.2} parent=5 // pred_check_branch
        %40 = sbr.rel (%p38) target = $region16
      $region15: #{custom-call.2} parent=5 // pred_region
        %s41 = sand.u32 %s3, 1
        %s42 = sand.u32 %s3, 1
        %s43 = smul.addr %s42, 32
        %s44 = scalar_lea.vmem [#allocation0], %s43
        %s45 = sadd.s32 %s12, %s11
        %s46 = smul.addr %s10, 4
        %s47 = sadd.s32 %s45, %s46
        %s48 = smul.addr %s47, 8
        %s49 = scalar_lea.vmem %s0, %s48
        // Predicated region
        $region17: #{custom-call.2} parent=15 // pred_check
          _
        $region18: #{custom-call.2} parent=15 // pred_check_branch
          %51 = sbr.rel (0) target = $region20
        $region19: #{custom-call.2} parent=15 // pred_region
          // Predicated region
          $region21: #{custom-call.2} parent=19 // pred_check
            _
          $region22: #{custom-call.2} parent=19 // pred_check_branch
            %53 = sbr.rel (0) target = $region24
          $region23: #{custom-call.2} parent=19 // pred_region
            // Predicated region
            $region36: #{custom-call.2} parent=23 // pred_check
              _
            $region37: #{custom-call.2} parent=23 // pred_check_branch
              %75 = sbr.rel (0) target = $region39
            $region38: #{custom-call.2} parent=23 // pred_region
              loop: start=0, step=1, limit=1
              $region40: #{custom-call.2} parent=38 // loop_pre_header
                _
              $region41: #{custom-call.2} parent=38 // loop_header
                %s77 = sphi 0, %s81
                %p78 = scmp.ge.s32.totalorder %s77, 1
                %s82 = sphi %s49, %s49
                %s83 = sphi %s44, %s44
              $region42: #{custom-call.2} parent=38 // loop_header_branch
                %80 = sbr.rel (%p78) target = $region46
              $region43: #{custom-call.2} parent=38 // loop_body
                %v84 = vld [vmem:[%s82] sm:$0xff]
                %85 = vst [vmem:[%s83] sm:$0xff] %v84
                %v86 = vld [vmem:[%s82 + $0x8] sm:$0xff]
                %87 = vst [vmem:[%s83 + $0x8] sm:$0xff] %v86
                %v88 = vld [vmem:[%s82 + $0x10] sm:$0xff]
                %89 = vst [vmem:[%s83 + $0x10] sm:$0xff] %v88
                %v90 = vld [vmem:[%s82 + $0x18] sm:$0xff]
                %91 = vst [vmem:[%s83 + $0x18] sm:$0xff] %v90
              $region44: #{custom-call.2} parent=38 // loop_footer
                %s81 = sadd.s32 1, %s77
              $region45: #{custom-call.2} parent=38 // loop_footer_branch
                %76 = sbr.rel target = $region41
              $region46: #{custom-call.2} parent=38 // loop_exit
                _
            $region39: #{custom-call.2} parent=23 // pred_fallthru
              _
            // Predicated region
            $region47: #{custom-call.2} parent=23 // pred_check
              _
            $region48: #{custom-call.2} parent=23 // pred_check_branch
              %93 = sbr.rel target = $region50
            $region49: #{custom-call.2} parent=23 // pred_region
              _
            $region50: #{custom-call.2} parent=23 // pred_fallthru
              _
          $region24: #{custom-call.2} parent=19 // pred_fallthru
            _
          // Predicated region
          $region25: #{custom-call.2} parent=19 // pred_check
            _
          $region26: #{custom-call.2} parent=19 // pred_check_branch
            %55 = sbr.rel target = $region28
          $region27: #{custom-call.2} parent=19 // pred_region
            %s57 = ssub.s32 256, 1
            loop: start=0, step=1, limit=1
            $region29: #{custom-call.2} parent=27 // loop_pre_header
              _
            $region30: #{custom-call.2} parent=27 // loop_header
              %s59 = sphi 0, %s63
              %p60 = scmp.ge.s32.totalorder %s59, 1
              %s64 = sphi %s49, %s49
              %s65 = sphi %s44, %s44
            $region31: #{custom-call.2} parent=27 // loop_header_branch
              %62 = sbr.rel (%p60) target = $region35
            $region32: #{custom-call.2} parent=27 // loop_body
              %v66 = vld [vmem:[%s64] sm:%s57]
              %67 = vst [vmem:[%s65] sm:%s57] %v66
              %v68 = vld [vmem:[%s64 + $0x8] sm:%s57]
              %69 = vst [vmem:[%s65 + $0x8] sm:%s57] %v68
              %v70 = vld [vmem:[%s64 + $0x10] sm:%s57]
              %71 = vst [vmem:[%s65 + $0x10] sm:%s57] %v70
              %v72 = vld [vmem:[%s64 + $0x18] sm:%s57]
              %73 = vst [vmem:[%s65 + $0x18] sm:%s57] %v72
            $region33: #{custom-call.2} parent=27 // loop_footer
              %s63 = sadd.s32 1, %s59
            $region34: #{custom-call.2} parent=27 // loop_footer_branch
              %58 = sbr.rel target = $region30
            $region35: #{custom-call.2} parent=27 // loop_exit
              _
          $region28: #{custom-call.2} parent=19 // pred_fallthru
            _
        $region20: #{custom-call.2} parent=15 // pred_fallthru
          _
        %94 = vnop
      $region16: #{custom-call.2} parent=5 // pred_fallthru
        _
      %p95 = scmp.le.s32.totalorder 1, %s3
      %p96 = scmp.lt.s32.totalorder %s3, 6
      %p97 = pnand %p95, %p96
      %p98 = pneg %p97
      // Predicated region
      $region51: #{custom-call.2} parent=5 // pred_check
        _
      $region52: #{custom-call.2} parent=5 // pred_check_branch
        %100 = sbr.rel (%p97) target = $region54
      $region53: #{custom-call.2} parent=5 // pred_region
        %s101 = ssub.s32 %s3, 1
        %s102 = sand.u32 %s8, 1
        %s103 = sand.u32 %s8, 1
        %s104 = smul.addr %s103, 32
        %s105 = scalar_lea.vmem [#allocation0], %s104
        %s106 = sand.u32 %s8, 1
        %s107 = sand.u32 %s8, 1
        %s108 = smul.addr %s107, 32
        %s109 = scalar_lea.vmem [#allocation0], %s108
        %s110 = sand.u32 %s8, 1
        %s111 = sand.u32 %s8, 1
        %s112 = smul.addr %s111, 32
        %s113 = scalar_lea.vmem [#allocation1], %s112
        %114 = vst [vmem:[%s113] sm:$0xff] 0.0
        %s115 = scalar_lea.vmem %s113, 8 [#allocation1]
        %116 = vst [vmem:[%s115] sm:$0xff] 0.0
        %s117 = scalar_lea.vmem %s113, 16 [#allocation1]
        %118 = vst [vmem:[%s117] sm:$0xff] 0.0
        %s119 = scalar_lea.vmem %s113, 24 [#allocation1]
        %120 = vst [vmem:[%s119] sm:$0xff] 0.0
        %vm121 = vcmask 7168
        %v122 = vld [vmem:[%s113] ss:$0 sm:$0xff]
        %v123 = vld [vmem:[%s105] ss:$0 sm:$0xff]
        %v124 = vmul.f32 %v122, %v122
        %125 = vadd.xlane.f32.xlu0 %v124
        %v126 = vpop.xlane.xlu0 %125
        %v127 = vsub.f32 %v123, %v126
        %v128 = vrsqrt.pop %v127
        %v129 = vld [vmem:[%s105] sm:$0xff]
        %v130 = vld [vmem:[%s113] sm:$0xff]
        %v131 = vmul.f32 %v130, %v122
        %132 = vadd.xlane.f32.xlu0 %v131
        %v133 = vpop.xlane.xlu0 %132
        %v134 = vsub.f32 %v129, %v133
        %v135 = vmul.f32 %v134, %v128
        %v136 = vsel %vm121, %v135, 0.0
        %v137 = vadd.f32 %v130, %v136
        %138 = vst [vmem:[%s113] sm:$0xff] %v137
        %s139 = scalar_lea.vmem %s105, 8 [#allocation0]
        %v140 = vld [vmem:[%s139] sm:$0xff]
        %s141 = scalar_lea.vmem %s113, 8 [#allocation1]
        %v142 = vld [vmem:[%s141] sm:$0xff]
        %v143 = vmul.f32 %v142, %v122
        %144 = vadd.xlane.f32.xlu0 %v143
        %v145 = vpop.xlane.xlu0 %144
        %v146 = vsub.f32 %v140, %v145
        %v147 = vmul.f32 %v146, %v128
        %v148 = vsel %vm121, %v147, 0.0
        %v149 = vadd.f32 %v142, %v148
        %s150 = scalar_lea.vmem %s113, 8 [#allocation1]
        %151 = vst [vmem:[%s150] sm:$0xff] %v149
        %s152 = scalar_lea.vmem %s105, 16 [#allocation0]
        %v153 = vld [vmem:[%s152] sm:$0xff]
        %s154 = scalar_lea.vmem %s113, 16 [#allocation1]
        %v155 = vld [vmem:[%s154] sm:$0xff]
        %v156 = vmul.f32 %v155, %v122
        %157 = vadd.xlane.f32.xlu0 %v156
        %v158 = vpop.xlane.xlu0 %157
        %v159 = vsub.f32 %v153, %v158
        %v160 = vmul.f32 %v159, %v128
        %v161 = vsel %vm121, %v160, 0.0
        %v162 = vadd.f32 %v155, %v161
        %s163 = scalar_lea.vmem %s113, 16 [#allocation1]
        %164 = vst [vmem:[%s163] sm:$0xff] %v162
        %s165 = scalar_lea.vmem %s105, 24 [#allocation0]
        %v166 = vld [vmem:[%s165] sm:$0xff]
        %s167 = scalar_lea.vmem %s113, 24 [#allocation1]
        %v168 = vld [vmem:[%s167] sm:$0xff]
        %v169 = vmul.f32 %v168, %v122
        %170 = vadd.xlane.f32.xlu0 %v169
        %v171 = vpop.xlane.xlu0 %170
        %v172 = vsub.f32 %v166, %v171
        %v173 = vmul.f32 %v172, %v128
        %v174 = vsel %vm121, %v173, 0.0
        %v175 = vadd.f32 %v168, %v174
        %s176 = scalar_lea.vmem %s113, 24 [#allocation1]
        %177 = vst [vmem:[%s176] sm:$0xff] %v175
        %vm178 = vcmask 15368
        %s179 = scalar_lea.vmem %s113, 1 [#allocation1]
        %v180 = vld [vmem:[%s179] ss:$0 sm:$0xff]
        %s181 = scalar_lea.vmem %s105, 1 [#allocation0]
        %v182 = vld [vmem:[%s181] ss:$0 sm:$0xff]
        %v183 = vmul.f32 %v180, %v180
        %184 = vadd.xlane.f32.xlu0 %v183
        %v185 = vpop.xlane.xlu0 %184
        %v186 = vsub.f32 %v182, %v185
        %v187 = vrsqrt.pop %v186
        %v188 = vld [vmem:[%s105] sm:$0xff]
        %v189 = vld [vmem:[%s113] sm:$0xff]
        %v190 = vmul.f32 %v189, %v180
        %191 = vadd.xlane.f32.xlu0 %v190
        %v192 = vpop.xlane.xlu0 %191
        %v193 = vsub.f32 %v188, %v192
        %v194 = vmul.f32 %v193, %v187
        %vm195 = vcmask 1047553
        %vm196 = vmand %vm178, %vm195
        %v197 = vsel %vm196, %v194, 0.0
        %v198 = vadd.f32 %v189, %v197
        %199 = vst [vmem:[%s113] sm:$0xff] %v198
        %s200 = scalar_lea.vmem %s105, 8 [#allocation0]
        %v201 = vld [vmem:[%s200] sm:$0xff]
        %s202 = scalar_lea.vmem %s113, 8 [#allocation1]
        %v203 = vld [vmem:[%s202] sm:$0xff]
        %v204 = vmul.f32 %v203, %v180
        %205 = vadd.xlane.f32.xlu0 %v204
        %v206 = vpop.xlane.xlu0 %205
        %v207 = vsub.f32 %v201, %v206
        %v208 = vmul.f32 %v207, %v187
        %v209 = vsel %vm178, %v208, 0.0
        %v210 = vadd.f32 %v203, %v209
        %s211 = scalar_lea.vmem %s113, 8 [#allocation1]
        %212 = vst [vmem:[%s211] sm:$0xff] %v210
        %s213 = scalar_lea.vmem %s105, 16 [#allocation0]
        %v214 = vld [vmem:[%s213] sm:$0xff]
        %s215 = scalar_lea.vmem %s113, 16 [#allocation1]
        %v216 = vld [vmem:[%s215] sm:$0xff]
        %v217 = vmul.f32 %v216, %v180
        %218 = vadd.xlane.f32.xlu0 %v217
        %v219 = vpop.xlane.xlu0 %218
        %v220 = vsub.f32 %v214, %v219
        %v221 = vmul.f32 %v220, %v187
        %v222 = vsel %vm178, %v221, 0.0
        %v223 = vadd.f32 %v216, %v222
        %s224 = scalar_lea.vmem %s113, 16 [#allocation1]
        %225 = vst [vmem:[%s224] sm:$0xff] %v223
        %s226 = scalar_lea.vmem %s105, 24 [#allocation0]
        %v227 = vld [vmem:[%s226] sm:$0xff]
        %s228 = scalar_lea.vmem %s113, 24 [#allocation1]
        %v229 = vld [vmem:[%s228] sm:$0xff]
        %v230 = vmul.f32 %v229, %v180
        %231 = vadd.xlane.f32.xlu0 %v230
        %v232 = vpop.xlane.xlu0 %231
        %v233 = vsub.f32 %v227, %v232
        %v234 = vmul.f32 %v233, %v187
        %v235 = vsel %vm178, %v234, 0.0
        %v236 = vadd.f32 %v229, %v235
        %s237 = scalar_lea.vmem %s113, 24 [#allocation1]
        %238 = vst [vmem:[%s237] sm:$0xff] %v236
        %vm239 = vcmask 23568
        %s240 = scalar_lea.vmem %s113, 2 [#allocation1]
        %v241 = vld [vmem:[%s240] ss:$0 sm:$0xff]
        %s242 = scalar_lea.vmem %s105, 2 [#allocation0]
        %v243 = vld [vmem:[%s242] ss:$0 sm:$0xff]
        %v244 = vmul.f32 %v241, %v241
        %245 = vadd.xlane.f32.xlu0 %v244
        %v246 = vpop.xlane.xlu0 %245
        %v247 = vsub.f32 %v243, %v246
        %v248 = vrsqrt.pop %v247
        %v249 = vld [vmem:[%s105] sm:$0xff]
        %v250 = vld [vmem:[%s113] sm:$0xff]
        %v251 = vmul.f32 %v250, %v241
        %252 = vadd.xlane.f32.xlu0 %v251
        %v253 = vpop.xlane.xlu0 %252
        %v254 = vsub.f32 %v249, %v253
        %v255 = vmul.f32 %v254, %v248
        %vm256 = vcmask 1047554
        %vm257 = vmand %vm239, %vm256
        %v258 = vsel %vm257, %v255, 0.0
        %v259 = vadd.f32 %v250, %v258
        %260 = vst [vmem:[%s113] sm:$0xff] %v259
        %s261 = scalar_lea.vmem %s105, 8 [#allocation0]
        %v262 = vld [vmem:[%s261] sm:$0xff]
        %s263 = scalar_lea.vmem %s113, 8 [#allocation1]
        %v264 = vld [vmem:[%s263] sm:$0xff]
        %v265 = vmul.f32 %v264, %v241
        %266 = vadd.xlane.f32.xlu0 %v265
        %v267 = vpop.xlane.xlu0 %266
        %v268 = vsub.f32 %v262, %v267
        %v269 = vmul.f32 %v268, %v248
        %v270 = vsel %vm239, %v269, 0.0
        %v271 = vadd.f32 %v264, %v270
        %s272 = scalar_lea.vmem %s113, 8 [#allocation1]
        %273 = vst [vmem:[%s272] sm:$0xff] %v271
        %s274 = scalar_lea.vmem %s105, 16 [#allocation0]
        %v275 = vld [vmem:[%s274] sm:$0xff]
        %s276 = scalar_lea.vmem %s113, 16 [#allocation1]
        %v277 = vld [vmem:[%s276] sm:$0xff]
        %v278 = vmul.f32 %v277, %v241
        %279 = vadd.xlane.f32.xlu0 %v278
        %v280 = vpop.xlane.xlu0 %279
        %v281 = vsub.f32 %v275, %v280
        %v282 = vmul.f32 %v281, %v248
        %v283 = vsel %vm239, %v282, 0.0
        %v284 = vadd.f32 %v277, %v283
        %s285 = scalar_lea.vmem %s113, 16 [#allocation1]
        %286 = vst [vmem:[%s285] sm:$0xff] %v284
        %s287 = scalar_lea.vmem %s105, 24 [#allocation0]
        %v288 = vld [vmem:[%s287] sm:$0xff]
        %s289 = scalar_lea.vmem %s113, 24 [#allocation1]
        %v290 = vld [vmem:[%s289] sm:$0xff]
        %v291 = vmul.f32 %v290, %v241
        %292 = vadd.xlane.f32.xlu0 %v291
        %v293 = vpop.xlane.xlu0 %292
        %v294 = vsub.f32 %v288, %v293
        %v295 = vmul.f32 %v294, %v248
        %v296 = vsel %vm239, %v295, 0.0
        %v297 = vadd.f32 %v290, %v296
        %s298 = scalar_lea.vmem %s113, 24 [#allocation1]
        %299 = vst [vmem:[%s298] sm:$0xff] %v297
        %vm300 = vcmask 31768
        %s301 = scalar_lea.vmem %s113, 3 [#allocation1]
        %v302 = vld [vmem:[%s301] ss:$0 sm:$0xff]
        %s303 = scalar_lea.vmem %s105, 3 [#allocation0]
        %v304 = vld [vmem:[%s303] ss:$0 sm:$0xff]
        %v305 = vmul.f32 %v302, %v302
        %306 = vadd.xlane.f32.xlu0 %v305
        %v307 = vpop.xlane.xlu0 %306
        %v308 = vsub.f32 %v304, %v307
        %v309 = vrsqrt.pop %v308
        %v310 = vld [vmem:[%s105] sm:$0xff]
        %v311 = vld [vmem:[%s113] sm:$0xff]
        %v312 = vmul.f32 %v311, %v302
        %313 = vadd.xlane.f32.xlu0 %v312
        %v314 = vpop.xlane.xlu0 %313
        %v315 = vsub.f32 %v310, %v314
        %v316 = vmul.f32 %v315, %v309
        %vm317 = vcmask 1047555
        %vm318 = vmand %vm300, %vm317
        %v319 = vsel %vm318, %v316, 0.0
        %v320 = vadd.f32 %v311, %v319
        %321 = vst [vmem:[%s113] sm:$0xff] %v320
        %s322 = scalar_lea.vmem %s105, 8 [#allocation0]
        %v323 = vld [vmem:[%s322] sm:$0xff]
        %s324 = scalar_lea.vmem %s113, 8 [#allocation1]
        %v325 = vld [vmem:[%s324] sm:$0xff]
        %v326 = vmul.f32 %v325, %v302
        %327 = vadd.xlane.f32.xlu0 %v326
        %v328 = vpop.xlane.xlu0 %327
        %v329 = vsub.f32 %v323, %v328
        %v330 = vmul.f32 %v329, %v309
        %v331 = vsel %vm300, %v330, 0.0
        %v332 = vadd.f32 %v325, %v331
        %s333 = scalar_lea.vmem %s113, 8 [#allocation1]
        %334 = vst [vmem:[%s333] sm:$0xff] %v332
        %s335 = scalar_lea.vmem %s105, 16 [#allocation0]
        %v336 = vld [vmem:[%s335] sm:$0xff]
        %s337 = scalar_lea.vmem %s113, 16 [#allocation1]
        %v338 = vld [vmem:[%s337] sm:$0xff]
        %v339 = vmul.f32 %v338, %v302
        %340 = vadd.xlane.f32.xlu0 %v339
        %v341 = vpop.xlane.xlu0 %340
        %v342 = vsub.f32 %v336, %v341
        %v343 = vmul.f32 %v342, %v309
        %v344 = vsel %vm300, %v343, 0.0
        %v345 = vadd.f32 %v338, %v344
        %s346 = scalar_lea.vmem %s113, 16 [#allocation1]
        %347 = vst [vmem:[%s346] sm:$0xff] %v345
        %s348 = scalar_lea.vmem %s105, 24 [#allocation0]
        %v349 = vld [vmem:[%s348] sm:$0xff]
        %s350 = scalar_lea.vmem %s113, 24 [#allocation1]
        %v351 = vld [vmem:[%s350] sm:$0xff]
        %v352 = vmul.f32 %v351, %v302
        %353 = vadd.xlane.f32.xlu0 %v352
        %v354 = vpop.xlane.xlu0 %353
        %v355 = vsub.f32 %v349, %v354
        %v356 = vmul.f32 %v355, %v309
        %v357 = vsel %vm300, %v356, 0.0
        %v358 = vadd.f32 %v351, %v357
        %s359 = scalar_lea.vmem %s113, 24 [#allocation1]
        %360 = vst [vmem:[%s359] sm:$0xff] %v358
        %vm361 = vcmask 39968
        %s362 = scalar_lea.vmem %s113, 4 [#allocation1]
        %v363 = vld [vmem:[%s362] ss:$0 sm:$0xff]
        %s364 = scalar_lea.vmem %s105, 4 [#allocation0]
        %v365 = vld [vmem:[%s364] ss:$0 sm:$0xff]
        %v366 = vmul.f32 %v363, %v363
        %367 = vadd.xlane.f32.xlu0 %v366
        %v368 = vpop.xlane.xlu0 %367
        %v369 = vsub.f32 %v365, %v368
        %v370 = vrsqrt.pop %v369
        %v371 = vld [vmem:[%s105] sm:$0xff]
        %v372 = vld [vmem:[%s113] sm:$0xff]
        %v373 = vmul.f32 %v372, %v363
        %374 = vadd.xlane.f32.xlu0 %v373
        %v375 = vpop.xlane.xlu0 %374
        %v376 = vsub.f32 %v371, %v375
        %v377 = vmul.f32 %v376, %v370
        %vm378 = vcmask 1047556
        %vm379 = vmand %vm361, %vm378
        %v380 = vsel %vm379, %v377, 0.0
        %v381 = vadd.f32 %v372, %v380
        %382 = vst [vmem:[%s113] sm:$0xff] %v381
        %s383 = scalar_lea.vmem %s105, 8 [#allocation0]
        %v384 = vld [vmem:[%s383] sm:$0xff]
        %s385 = scalar_lea.vmem %s113, 8 [#allocation1]
        %v386 = vld [vmem:[%s385] sm:$0xff]
        %v387 = vmul.f32 %v386, %v363
        %388 = vadd.xlane.f32.xlu0 %v387
        %v389 = vpop.xlane.xlu0 %388
        %v390 = vsub.f32 %v384, %v389
        %v391 = vmul.f32 %v390, %v370
        %v392 = vsel %vm361, %v391, 0.0
        %v393 = vadd.f32 %v386, %v392
        %s394 = scalar_lea.vmem %s113, 8 [#allocation1]
        %395 = vst [vmem:[%s394] sm:$0xff] %v393
        %s396 = scalar_lea.vmem %s105, 16 [#allocation0]
        %v397 = vld [vmem:[%s396] sm:$0xff]
        %s398 = scalar_lea.vmem %s113, 16 [#allocation1]
        %v399 = vld [vmem:[%s398] sm:$0xff]
        %v400 = vmul.f32 %v399, %v363
        %401 = vadd.xlane.f32.xlu0 %v400
        %v402 = vpop.xlane.xlu0 %401
        %v403 = vsub.f32 %v397, %v402
        %v404 = vmul.f32 %v403, %v370
        %v405 = vsel %vm361, %v404, 0.0
        %v406 = vadd.f32 %v399, %v405
        %s407 = scalar_lea.vmem %s113, 16 [#allocation1]
        %408 = vst [vmem:[%s407] sm:$0xff] %v406
        %s409 = scalar_lea.vmem %s105, 24 [#allocation0]
        %v410 = vld [vmem:[%s409] sm:$0xff]
        %s411 = scalar_lea.vmem %s113, 24 [#allocation1]
        %v412 = vld [vmem:[%s411] sm:$0xff]
        %v413 = vmul.f32 %v412, %v363
        %414 = vadd.xlane.f32.xlu0 %v413
        %v415 = vpop.xlane.xlu0 %414
        %v416 = vsub.f32 %v410, %v415
        %v417 = vmul.f32 %v416, %v370
        %v418 = vsel %vm361, %v417, 0.0
        %v419 = vadd.f32 %v412, %v418
        %s420 = scalar_lea.vmem %s113, 24 [#allocation1]
        %421 = vst [vmem:[%s420] sm:$0xff] %v419
        %vm422 = vcmask 48168
        %s423 = scalar_lea.vmem %s113, 5 [#allocation1]
        %v424 = vld [vmem:[%s423] ss:$0 sm:$0xff]
        %s425 = scalar_lea.vmem %s105, 5 [#allocation0]
        %v426 = vld [vmem:[%s425] ss:$0 sm:$0xff]
        %v427 = vmul.f32 %v424, %v424
        %428 = vadd.xlane.f32.xlu0 %v427
        %v429 = vpop.xlane.xlu0 %428
        %v430 = vsub.f32 %v426, %v429
        %v431 = vrsqrt.pop %v430
        %v432 = vld [vmem:[%s105] sm:$0xff]
        %v433 = vld [vmem:[%s113] sm:$0xff]
        %v434 = vmul.f32 %v433, %v424
        %435 = vadd.xlane.f32.xlu0 %v434
        %v436 = vpop.xlane.xlu0 %435
        %v437 = vsub.f32 %v432, %v436
        %v438 = vmul.f32 %v437, %v431
        %vm439 = vcmask 1047557
        %vm440 = vmand %vm422, %vm439
        %v441 = vsel %vm440, %v438, 0.0
        %v442 = vadd.f32 %v433, %v441
        %443 = vst [vmem:[%s113] sm:$0xff] %v442
        %s444 = scalar_lea.vmem %s105, 8 [#allocation0]
        %v445 = vld [vmem:[%s444] sm:$0xff]
        %s446 = scalar_lea.vmem %s113, 8 [#allocation1]
        %v447 = vld [vmem:[%s446] sm:$0xff]
        %v448 = vmul.f32 %v447, %v424
        %449 = vadd.xlane.f32.xlu0 %v448
        %v450 = vpop.xlane.xlu0 %449
        %v451 = vsub.f32 %v445, %v450
        %v452 = vmul.f32 %v451, %v431
        %v453 = vsel %vm422, %v452, 0.0
        %v454 = vadd.f32 %v447, %v453
        %s455 = scalar_lea.vmem %s113, 8 [#allocation1]
        %456 = vst [vmem:[%s455] sm:$0xff] %v454
        %s457 = scalar_lea.vmem %s105, 16 [#allocation0]
        %v458 = vld [vmem:[%s457] sm:$0xff]
        %s459 = scalar_lea.vmem %s113, 16 [#allocation1]
        %v460 = vld [vmem:[%s459] sm:$0xff]
        %v461 = vmul.f32 %v460, %v424
        %462 = vadd.xlane.f32.xlu0 %v461
        %v463 = vpop.xlane.xlu0 %462
        %v464 = vsub.f32 %v458, %v463
        %v465 = vmul.f32 %v464, %v431
        %v466 = vsel %vm422, %v465, 0.0
        %v467 = vadd.f32 %v460, %v466
        %s468 = scalar_lea.vmem %s113, 16 [#allocation1]
        %469 = vst [vmem:[%s468] sm:$0xff] %v467
        %s470 = scalar_lea.vmem %s105, 24 [#allocation0]
        %v471 = vld [vmem:[%s470] sm:$0xff]
        %s472 = scalar_lea.vmem %s113, 24 [#allocation1]
        %v473 = vld [vmem:[%s472] sm:$0xff]
        %v474 = vmul.f32 %v473, %v424
        %475 = vadd.xlane.f32.xlu0 %v474
        %v476 = vpop.xlane.xlu0 %475
        %v477 = vsub.f32 %v471, %v476
        %v478 = vmul.f32 %v477, %v431
        %v479 = vsel %vm422, %v478, 0.0
        %v480 = vadd.f32 %v473, %v479
        %s481 = scalar_lea.vmem %s113, 24 [#allocation1]
        %482 = vst [vmem:[%s481] sm:$0xff] %v480
        %vm483 = vcmask 56368
        %s484 = scalar_lea.vmem %s113, 6 [#allocation1]
        %v485 = vld [vmem:[%s484] ss:$0 sm:$0xff]
        %s486 = scalar_lea.vmem %s105, 6 [#allocation0]
        %v487 = vld [vmem:[%s486] ss:$0 sm:$0xff]
        %v488 = vmul.f32 %v485, %v485
        %489 = vadd.xlane.f32.xlu0 %v488
        %v490 = vpop.xlane.xlu0 %489
        %v491 = vsub.f32 %v487, %v490
        %v492 = vrsqrt.pop %v491
        %v493 = vld [vmem:[%s105] sm:$0xff]
        %v494 = vld [vmem:[%s113] sm:$0xff]
        %v495 = vmul.f32 %v494, %v485
        %496 = vadd.xlane.f32.xlu0 %v495
        %v497 = vpop.xlane.xlu0 %496
        %v498 = vsub.f32 %v493, %v497
        %v499 = vmul.f32 %v498, %v492
        %vm500 = vcmask 1047558
        %vm501 = vmand %vm483, %vm500
        %v502 = vsel %vm501, %v499, 0.0
        %v503 = vadd.f32 %v494, %v502
        %504 = vst [vmem:[%s113] sm:$0xff] %v503
        %s505 = scalar_lea.vmem %s105, 8 [#allocation0]
        %v506 = vld [vmem:[%s505] sm:$0xff]
        %s507 = scalar_lea.vmem %s113, 8 [#allocation1]
        %v508 = vld [vmem:[%s507] sm:$0xff]
        %v509 = vmul.f32 %v508, %v485
        %510 = vadd.xlane.f32.xlu0 %v509
        %v511 = vpop.xlane.xlu0 %510
        %v512 = vsub.f32 %v506, %v511
        %v513 = vmul.f32 %v512, %v492
        %v514 = vsel %vm483, %v513, 0.0
        %v515 = vadd.f32 %v508, %v514
        %s516 = scalar_lea.vmem %s113, 8 [#allocation1]
        %517 = vst [vmem:[%s516] sm:$0xff] %v515
        %s518 = scalar_lea.vmem %s105, 16 [#allocation0]
        %v519 = vld [vmem:[%s518] sm:$0xff]
        %s520 = scalar_lea.vmem %s113, 16 [#allocation1]
        %v521 = vld [vmem:[%s520] sm:$0xff]
        %v522 = vmul.f32 %v521, %v485
        %523 = vadd.xlane.f32.xlu0 %v522
        %v524 = vpop.xlane.xlu0 %523
        %v525 = vsub.f32 %v519, %v524
        %v526 = vmul.f32 %v525, %v492
        %v527 = vsel %vm483, %v526, 0.0
        %v528 = vadd.f32 %v521, %v527
        %s529 = scalar_lea.vmem %s113, 16 [#allocation1]
        %530 = vst [vmem:[%s529] sm:$0xff] %v528
        %s531 = scalar_lea.vmem %s105, 24 [#allocation0]
        %v532 = vld [vmem:[%s531] sm:$0xff]
        %s533 = scalar_lea.vmem %s113, 24 [#allocation1]
        %v534 = vld [vmem:[%s533] sm:$0xff]
        %v535 = vmul.f32 %v534, %v485
        %536 = vadd.xlane.f32.xlu0 %v535
        %v537 = vpop.xlane.xlu0 %536
        %v538 = vsub.f32 %v532, %v537
        %v539 = vmul.f32 %v538, %v492
        %v540 = vsel %vm483, %v539, 0.0
        %v541 = vadd.f32 %v534, %v540
        %s542 = scalar_lea.vmem %s113, 24 [#allocation1]
        %543 = vst [vmem:[%s542] sm:$0xff] %v541
        %vm544 = vcmask 64568
        %s545 = scalar_lea.vmem %s113, 7 [#allocation1]
        %v546 = vld [vmem:[%s545] ss:$0 sm:$0xff]
        %s547 = scalar_lea.vmem %s105, 7 [#allocation0]
        %v548 = vld [vmem:[%s547] ss:$0 sm:$0xff]
        %v549 = vmul.f32 %v546, %v546
        %550 = vadd.xlane.f32.xlu0 %v549
        %v551 = vpop.xlane.xlu0 %550
        %v552 = vsub.f32 %v548, %v551
        %v553 = vrsqrt.pop %v552
        %v554 = vld [vmem:[%s105] sm:$0xff]
        %v555 = vld [vmem:[%s113] sm:$0xff]
        %v556 = vmul.f32 %v555, %v546
        %557 = vadd.xlane.f32.xlu0 %v556
        %v558 = vpop.xlane.xlu0 %557
        %v559 = vsub.f32 %v554, %v558
        %v560 = vmul.f32 %v559, %v553
        %vm561 = vcmask 1047559
        %vm562 = vmand %vm544, %vm561
        %v563 = vsel %vm562, %v560, 0.0
        %v564 = vadd.f32 %v555, %v563
        %565 = vst [vmem:[%s113] sm:$0xff] %v564
        %s566 = scalar_lea.vmem %s105, 8 [#allocation0]
        %v567 = vld [vmem:[%s566] sm:$0xff]
        %s568 = scalar_lea.vmem %s113, 8 [#allocation1]
        %v569 = vld [vmem:[%s568] sm:$0xff]
        %v570 = vmul.f32 %v569, %v546
        %571 = vadd.xlane.f32.xlu0 %v570
        %v572 = vpop.xlane.xlu0 %571
        %v573 = vsub.f32 %v567, %v572
        %v574 = vmul.f32 %v573, %v553
        %v575 = vsel %vm544, %v574, 0.0
        %v576 = vadd.f32 %v569, %v575
        %s577 = scalar_lea.vmem %s113, 8 [#allocation1]
        %578 = vst [vmem:[%s577] sm:$0xff] %v576
        %s579 = scalar_lea.vmem %s105, 16 [#allocation0]
        %v580 = vld [vmem:[%s579] sm:$0xff]
        %s581 = scalar_lea.vmem %s113, 16 [#allocation1]
        %v582 = vld [vmem:[%s581] sm:$0xff]
        %v583 = vmul.f32 %v582, %v546
        %584 = vadd.xlane.f32.xlu0 %v583
        %v585 = vpop.xlane.xlu0 %584
        %v586 = vsub.f32 %v580, %v585
        %v587 = vmul.f32 %v586, %v553
        %v588 = vsel %vm544, %v587, 0.0
        %v589 = vadd.f32 %v582, %v588
        %s590 = scalar_lea.vmem %s113, 16 [#allocation1]
        %591 = vst [vmem:[%s590] sm:$0xff] %v589
        %s592 = scalar_lea.vmem %s105, 24 [#allocation0]
        %v593 = vld [vmem:[%s592] sm:$0xff]
        %s594 = scalar_lea.vmem %s113, 24 [#allocation1]
        %v595 = vld [vmem:[%s594] sm:$0xff]
        %v596 = vmul.f32 %v595, %v546
        %597 = vadd.xlane.f32.xlu0 %v596
        %v598 = vpop.xlane.xlu0 %597
        %v599 = vsub.f32 %v593, %v598
        %v600 = vmul.f32 %v599, %v553
        %v601 = vsel %vm544, %v600, 0.0
        %v602 = vadd.f32 %v595, %v601
        %s603 = scalar_lea.vmem %s113, 24 [#allocation1]
        %604 = vst [vmem:[%s603] sm:$0xff] %v602
        %vm605 = vcmask 72768
        %s606 = scalar_lea.vmem %s113, 8 [#allocation1]
        %v607 = vld [vmem:[%s606] ss:$0 sm:$0xff]
        %s608 = scalar_lea.vmem %s105, 8 [#allocation0]
        %v609 = vld [vmem:[%s608] ss:$0 sm:$0xff]
        %v610 = vmul.f32 %v607, %v607
        %611 = vadd.xlane.f32.xlu0 %v610
        %v612 = vpop.xlane.xlu0 %611
        %v613 = vsub.f32 %v609, %v612
        %v614 = vrsqrt.pop %v613
        %s615 = scalar_lea.vmem %s105, 8 [#allocation0]
        %v616 = vld [vmem:[%s615] sm:$0xff]
        %s617 = scalar_lea.vmem %s113, 8 [#allocation1]
        %v618 = vld [vmem:[%s617] sm:$0xff]
        %v619 = vmul.f32 %v618, %v607
        %620 = vadd.xlane.f32.xlu0 %v619
        %v621 = vpop.xlane.xlu0 %620
        %v622 = vsub.f32 %v616, %v621
        %v623 = vmul.f32 %v622, %v614
        %v624 = vsel %vm605, %v623, 0.0
        %v625 = vadd.f32 %v618, %v624
        %s626 = scalar_lea.vmem %s113, 8 [#allocation1]
        %627 = vst [vmem:[%s626] sm:$0xff] %v625
        %s628 = scalar_lea.vmem %s105, 16 [#allocation0]
        %v629 = vld [vmem:[%s628] sm:$0xff]
        %s630 = scalar_lea.vmem %s113, 16 [#allocation1]
        %v631 = vld [vmem:[%s630] sm:$0xff]
        %v632 = vmul.f32 %v631, %v607
        %633 = vadd.xlane.f32.xlu0 %v632
        %v634 = vpop.xlane.xlu0 %633
        %v635 = vsub.f32 %v629, %v634
        %v636 = vmul.f32 %v635, %v614
        %v637 = vsel %vm605, %v636, 0.0
        %v638 = vadd.f32 %v631, %v637
        %s639 = scalar_lea.vmem %s113, 16 [#allocation1]
        %640 = vst [vmem:[%s639] sm:$0xff] %v638
        %s641 = scalar_lea.vmem %s105, 24 [#allocation0]
        %v642 = vld [vmem:[%s641] sm:$0xff]
        %s643 = scalar_lea.vmem %s113, 24 [#allocation1]
        %v644 = vld [vmem:[%s643] sm:$0xff]
        %v645 = vmul.f32 %v644, %v607
        %646 = vadd.xlane.f32.xlu0 %v645
        %v647 = vpop.xlane.xlu0 %646
        %v648 = vsub.f32 %v642, %v647
        %v649 = vmul.f32 %v648, %v614
        %v650 = vsel %vm605, %v649, 0.0
        %v651 = vadd.f32 %v644, %v650
        %s652 = scalar_lea.vmem %s113, 24 [#allocation1]
        %653 = vst [vmem:[%s652] sm:$0xff] %v651
        %vm654 = vcmask 80968
        %s655 = scalar_lea.vmem %s113, 9 [#allocation1]
        %v656 = vld [vmem:[%s655] ss:$0 sm:$0xff]
        %s657 = scalar_lea.vmem %s105, 9 [#allocation0]
        %v658 = vld [vmem:[%s657] ss:$0 sm:$0xff]
        %v659 = vmul.f32 %v656, %v656
        %660 = vadd.xlane.f32.xlu0 %v659
        %v661 = vpop.xlane.xlu0 %660
        %v662 = vsub.f32 %v658, %v661
        %v663 = vrsqrt.pop %v662
        %s664 = scalar_lea.vmem %s105, 8 [#allocation0]
        %v665 = vld [vmem:[%s664] sm:$0xff]
        %s666 = scalar_lea.vmem %s113, 8 [#allocation1]
        %v667 = vld [vmem:[%s666] sm:$0xff]
        %v668 = vmul.f32 %v667, %v656
        %669 = vadd.xlane.f32.xlu0 %v668
        %v670 = vpop.xlane.xlu0 %669
        %v671 = vsub.f32 %v665, %v670
        %v672 = vmul.f32 %v671, %v663
        %vm673 = vcmask 1047553
        %vm674 = vmand %vm654, %vm673
        %v675 = vsel %vm674, %v672, 0.0
        %v676 = vadd.f32 %v667, %v675
        %s677 = scalar_lea.vmem %s113, 8 [#allocation1]
        %678 = vst [vmem:[%s677] sm:$0xff] %v676
        %s679 = scalar_lea.vmem %s105, 16 [#allocation0]
        %v680 = vld [vmem:[%s679] sm:$0xff]
        %s681 = scalar_lea.vmem %s113, 16 [#allocation1]
        %v682 = vld [vmem:[%s681] sm:$0xff]
        %v683 = vmul.f32 %v682, %v656
        %684 = vadd.xlane.f32.xlu0 %v683
        %v685 = vpop.xlane.xlu0 %684
        %v686 = vsub.f32 %v680, %v685
        %v687 = vmul.f32 %v686, %v663
        %v688 = vsel %vm654, %v687, 0.0
        %v689 = vadd.f32 %v682, %v688
        %s690 = scalar_lea.vmem %s113, 16 [#allocation1]
        %691 = vst [vmem:[%s690] sm:$0xff] %v689
        %s692 = scalar_lea.vmem %s105, 24 [#allocation0]
        %v693 = vld [vmem:[%s692] sm:$0xff]
        %s694 = scalar_lea.vmem %s113, 24 [#allocation1]
        %v695 = vld [vmem:[%s694] sm:$0xff]
        %v696 = vmul.f32 %v695, %v656
        %697 = vadd.xlane.f32.xlu0 %v696
        %v698 = vpop.xlane.xlu0 %697
        %v699 = vsub.f32 %v693, %v698
        %v700 = vmul.f32 %v699, %v663
        %v701 = vsel %vm654, %v700, 0.0
        %v702 = vadd.f32 %v695, %v701
        %s703 = scalar_lea.vmem %s113, 24 [#allocation1]
        %704 = vst [vmem:[%s703] sm:$0xff] %v702
        %vm705 = vcmask 89168
        %s706 = scalar_lea.vmem %s113, 10 [#allocation1]
        %v707 = vld [vmem:[%s706] ss:$0 sm:$0xff]
        %s708 = scalar_lea.vmem %s105, 10 [#allocation0]
        %v709 = vld [vmem:[%s708] ss:$0 sm:$0xff]
        %v710 = vmul.f32 %v707, %v707
        %711 = vadd.xlane.f32.xlu0 %v710
        %v712 = vpop.xlane.xlu0 %711
        %v713 = vsub.f32 %v709, %v712
        %v714 = vrsqrt.pop %v713
        %s715 = scalar_lea.vmem %s105, 8 [#allocation0]
        %v716 = vld [vmem:[%s715] sm:$0xff]
        %s717 = scalar_lea.vmem %s113, 8 [#allocation1]
        %v718 = vld [vmem:[%s717] sm:$0xff]
        %v719 = vmul.f32 %v718, %v707
        %720 = vadd.xlane.f32.xlu0 %v719
        %v721 = vpop.xlane.xlu0 %720
        %v722 = vsub.f32 %v716, %v721
        %v723 = vmul.f32 %v722, %v714
        %vm724 = vcmask 1047554
        %vm725 = vmand %vm705, %vm724
        %v726 = vsel %vm725, %v723, 0.0
        %v727 = vadd.f32 %v718, %v726
        %s728 = scalar_lea.vmem %s113, 8 [#allocation1]
        %729 = vst [vmem:[%s728] sm:$0xff] %v727
        %s730 = scalar_lea.vmem %s105, 16 [#allocation0]
        %v731 = vld [vmem:[%s730] sm:$0xff]
        %s732 = scalar_lea.vmem %s113, 16 [#allocation1]
        %v733 = vld [vmem:[%s732] sm:$0xff]
        %v734 = vmul.f32 %v733, %v707
        %735 = vadd.xlane.f32.xlu0 %v734
        %v736 = vpop.xlane.xlu0 %735
        %v737 = vsub.f32 %v731, %v736
        %v738 = vmul.f32 %v737, %v714
        %v739 = vsel %vm705, %v738, 0.0
        %v740 = vadd.f32 %v733, %v739
        %s741 = scalar_lea.vmem %s113, 16 [#allocation1]
        %742 = vst [vmem:[%s741] sm:$0xff] %v740
        %s743 = scalar_lea.vmem %s105, 24 [#allocation0]
        %v744 = vld [vmem:[%s743] sm:$0xff]
        %s745 = scalar_lea.vmem %s113, 24 [#allocation1]
        %v746 = vld [vmem:[%s745] sm:$0xff]
        %v747 = vmul.f32 %v746, %v707
        %748 = vadd.xlane.f32.xlu0 %v747
        %v749 = vpop.xlane.xlu0 %748
        %v750 = vsub.f32 %v744, %v749
        %v751 = vmul.f32 %v750, %v714
        %v752 = vsel %vm705, %v751, 0.0
        %v753 = vadd.f32 %v746, %v752
        %s754 = scalar_lea.vmem %s113, 24 [#allocation1]
        %755 = vst [vmem:[%s754] sm:$0xff] %v753
        %vm756 = vcmask 97368
        %s757 = scalar_lea.vmem %s113, 11 [#allocation1]
        %v758 = vld [vmem:[%s757] ss:$0 sm:$0xff]
        %s759 = scalar_lea.vmem %s105, 11 [#allocation0]
        %v760 = vld [vmem:[%s759] ss:$0 sm:$0xff]
        %v761 = vmul.f32 %v758, %v758
        %762 = vadd.xlane.f32.xlu0 %v761
        %v763 = vpop.xlane.xlu0 %762
        %v764 = vsub.f32 %v760, %v763
        %v765 = vrsqrt.pop %v764
        %s766 = scalar_lea.vmem %s105, 8 [#allocation0]
        %v767 = vld [vmem:[%s766] sm:$0xff]
        %s768 = scalar_lea.vmem %s113, 8 [#allocation1]
        %v769 = vld [vmem:[%s768] sm:$0xff]
        %v770 = vmul.f32 %v769, %v758
        %771 = vadd.xlane.f32.xlu0 %v770
        %v772 = vpop.xlane.xlu0 %771
        %v773 = vsub.f32 %v767, %v772
        %v774 = vmul.f32 %v773, %v765
        %vm775 = vcmask 1047555
        %vm776 = vmand %vm756, %vm775
        %v777 = vsel %vm776, %v774, 0.0
        %v778 = vadd.f32 %v769, %v777
        %s779 = scalar_lea.vmem %s113, 8 [#allocation1]
        %780 = vst [vmem:[%s779] sm:$0xff] %v778
        %s781 = scalar_lea.vmem %s105, 16 [#allocation0]
        %v782 = vld [vmem:[%s781] sm:$0xff]
        %s783 = scalar_lea.vmem %s113, 16 [#allocation1]
        %v784 = vld [vmem:[%s783] sm:$0xff]
        %v785 = vmul.f32 %v784, %v758
        %786 = vadd.xlane.f32.xlu0 %v785
        %v787 = vpop.xlane.xlu0 %786
        %v788 = vsub.f32 %v782, %v787
        %v789 = vmul.f32 %v788, %v765
        %v790 = vsel %vm756, %v789, 0.0
        %v791 = vadd.f32 %v784, %v790
        %s792 = scalar_lea.vmem %s113, 16 [#allocation1]
        %793 = vst [vmem:[%s792] sm:$0xff] %v791
        %s794 = scalar_lea.vmem %s105, 24 [#allocation0]
        %v795 = vld [vmem:[%s794] sm:$0xff]
        %s796 = scalar_lea.vmem %s113, 24 [#allocation1]
        %v797 = vld [vmem:[%s796] sm:$0xff]
        %v798 = vmul.f32 %v797, %v758
        %799 = vadd.xlane.f32.xlu0 %v798
        %v800 = vpop.xlane.xlu0 %799
        %v801 = vsub.f32 %v795, %v800
        %v802 = vmul.f32 %v801, %v765
        %v803 = vsel %vm756, %v802, 0.0
        %v804 = vadd.f32 %v797, %v803
        %s805 = scalar_lea.vmem %s113, 24 [#allocation1]
        %806 = vst [vmem:[%s805] sm:$0xff] %v804
        %vm807 = vcmask 105568
        %s808 = scalar_lea.vmem %s113, 12 [#allocation1]
        %v809 = vld [vmem:[%s808] ss:$0 sm:$0xff]
        %s810 = scalar_lea.vmem %s105, 12 [#allocation0]
        %v811 = vld [vmem:[%s810] ss:$0 sm:$0xff]
        %v812 = vmul.f32 %v809, %v809
        %813 = vadd.xlane.f32.xlu0 %v812
        %v814 = vpop.xlane.xlu0 %813
        %v815 = vsub.f32 %v811, %v814
        %v816 = vrsqrt.pop %v815
        %s817 = scalar_lea.vmem %s105, 8 [#allocation0]
        %v818 = vld [vmem:[%s817] sm:$0xff]
        %s819 = scalar_lea.vmem %s113, 8 [#allocation1]
        %v820 = vld [vmem:[%s819] sm:$0xff]
        %v821 = vmul.f32 %v820, %v809
        %822 = vadd.xlane.f32.xlu0 %v821
        %v823 = vpop.xlane.xlu0 %822
        %v824 = vsub.f32 %v818, %v823
        %v825 = vmul.f32 %v824, %v816
        %vm826 = vcmask 1047556
        %vm827 = vmand %vm807, %vm826
        %v828 = vsel %vm827, %v825, 0.0
        %v829 = vadd.f32 %v820, %v828
        %s830 = scalar_lea.vmem %s113, 8 [#allocation1]
        %831 = vst [vmem:[%s830] sm:$0xff] %v829
        %s832 = scalar_lea.vmem %s105, 16 [#allocation0]
        %v833 = vld [vmem:[%s832] sm:$0xff]
        %s834 = scalar_lea.vmem %s113, 16 [#allocation1]
        %v835 = vld [vmem:[%s834] sm:$0xff]
        %v836 = vmul.f32 %v835, %v809
        %837 = vadd.xlane.f32.xlu0 %v836
        %v838 = vpop.xlane.xlu0 %837
        %v839 = vsub.f32 %v833, %v838
        %v840 = vmul.f32 %v839, %v816
        %v841 = vsel %vm807, %v840, 0.0
        %v842 = vadd.f32 %v835, %v841
        %s843 = scalar_lea.vmem %s113, 16 [#allocation1]
        %844 = vst [vmem:[%s843] sm:$0xff] %v842
        %s845 = scalar_lea.vmem %s105, 24 [#allocation0]
        %v846 = vld [vmem:[%s845] sm:$0xff]
        %s847 = scalar_lea.vmem %s113, 24 [#allocation1]
        %v848 = vld [vmem:[%s847] sm:$0xff]
        %v849 = vmul.f32 %v848, %v809
        %850 = vadd.xlane.f32.xlu0 %v849
        %v851 = vpop.xlane.xlu0 %850
        %v852 = vsub.f32 %v846, %v851
        %v853 = vmul.f32 %v852, %v816
        %v854 = vsel %vm807, %v853, 0.0
        %v855 = vadd.f32 %v848, %v854
        %s856 = scalar_lea.vmem %s113, 24 [#allocation1]
        %857 = vst [vmem:[%s856] sm:$0xff] %v855
        %vm858 = vcmask 113768
        %s859 = scalar_lea.vmem %s113, 13 [#allocation1]
        %v860 = vld [vmem:[%s859] ss:$0 sm:$0xff]
        %s861 = scalar_lea.vmem %s105, 13 [#allocation0]
        %v862 = vld [vmem:[%s861] ss:$0 sm:$0xff]
        %v863 = vmul.f32 %v860, %v860
        %864 = vadd.xlane.f32.xlu0 %v863
        %v865 = vpop.xlane.xlu0 %864
        %v866 = vsub.f32 %v862, %v865
        %v867 = vrsqrt.pop %v866
        %s868 = scalar_lea.vmem %s105, 8 [#allocation0]
        %v869 = vld [vmem:[%s868] sm:$0xff]
        %s870 = scalar_lea.vmem %s113, 8 [#allocation1]
        %v871 = vld [vmem:[%s870] sm:$0xff]
        %v872 = vmul.f32 %v871, %v860
        %873 = vadd.xlane.f32.xlu0 %v872
        %v874 = vpop.xlane.xlu0 %873
        %v875 = vsub.f32 %v869, %v874
        %v876 = vmul.f32 %v875, %v867
        %vm877 = vcmask 1047557
        %vm878 = vmand %vm858, %vm877
        %v879 = vsel %vm878, %v876, 0.0
        %v880 = vadd.f32 %v871, %v879
        %s881 = scalar_lea.vmem %s113, 8 [#allocation1]
        %882 = vst [vmem:[%s881] sm:$0xff] %v880
        %s883 = scalar_lea.vmem %s105, 16 [#allocation0]
        %v884 = vld [vmem:[%s883] sm:$0xff]
        %s885 = scalar_lea.vmem %s113, 16 [#allocation1]
        %v886 = vld [vmem:[%s885] sm:$0xff]
        %v887 = vmul.f32 %v886, %v860
        %888 = vadd.xlane.f32.xlu0 %v887
        %v889 = vpop.xlane.xlu0 %888
        %v890 = vsub.f32 %v884, %v889
        %v891 = vmul.f32 %v890, %v867
        %v892 = vsel %vm858, %v891, 0.0
        %v893 = vadd.f32 %v886, %v892
        %s894 = scalar_lea.vmem %s113, 16 [#allocation1]
        %895 = vst [vmem:[%s894] sm:$0xff] %v893
        %s896 = scalar_lea.vmem %s105, 24 [#allocation0]
        %v897 = vld [vmem:[%s896] sm:$0xff]
        %s898 = scalar_lea.vmem %s113, 24 [#allocation1]
        %v899 = vld [vmem:[%s898] sm:$0xff]
        %v900 = vmul.f32 %v899, %v860
        %901 = vadd.xlane.f32.xlu0 %v900
        %v902 = vpop.xlane.xlu0 %901
        %v903 = vsub.f32 %v897, %v902
        %v904 = vmul.f32 %v903, %v867
        %v905 = vsel %vm858, %v904, 0.0
        %v906 = vadd.f32 %v899, %v905
        %s907 = scalar_lea.vmem %s113, 24 [#allocation1]
        %908 = vst [vmem:[%s907] sm:$0xff] %v906
        %vm909 = vcmask 121968
        %s910 = scalar_lea.vmem %s113, 14 [#allocation1]
        %v911 = vld [vmem:[%s910] ss:$0 sm:$0xff]
        %s912 = scalar_lea.vmem %s105, 14 [#allocation0]
        %v913 = vld [vmem:[%s912] ss:$0 sm:$0xff]
        %v914 = vmul.f32 %v911, %v911
        %915 = vadd.xlane.f32.xlu0 %v914
        %v916 = vpop.xlane.xlu0 %915
        %v917 = vsub.f32 %v913, %v916
        %v918 = vrsqrt.pop %v917
        %s919 = scalar_lea.vmem %s105, 8 [#allocation0]
        %v920 = vld [vmem:[%s919] sm:$0xff]
        %s921 = scalar_lea.vmem %s113, 8 [#allocation1]
        %v922 = vld [vmem:[%s921] sm:$0xff]
        %v923 = vmul.f32 %v922, %v911
        %924 = vadd.xlane.f32.xlu0 %v923
        %v925 = vpop.xlane.xlu0 %924
        %v926 = vsub.f32 %v920, %v925
        %v927 = vmul.f32 %v926, %v918
        %vm928 = vcmask 1047558
        %vm929 = vmand %vm909, %vm928
        %v930 = vsel %vm929, %v927, 0.0
        %v931 = vadd.f32 %v922, %v930
        %s932 = scalar_lea.vmem %s113, 8 [#allocation1]
        %933 = vst [vmem:[%s932] sm:$0xff] %v931
        %s934 = scalar_lea.vmem %s105, 16 [#allocation0]
        %v935 = vld [vmem:[%s934] sm:$0xff]
        %s936 = scalar_lea.vmem %s113, 16 [#allocation1]
        %v937 = vld [vmem:[%s936] sm:$0xff]
        %v938 = vmul.f32 %v937, %v911
        %939 = vadd.xlane.f32.xlu0 %v938
        %v940 = vpop.xlane.xlu0 %939
        %v941 = vsub.f32 %v935, %v940
        %v942 = vmul.f32 %v941, %v918
        %v943 = vsel %vm909, %v942, 0.0
        %v944 = vadd.f32 %v937, %v943
        %s945 = scalar_lea.vmem %s113, 16 [#allocation1]
        %946 = vst [vmem:[%s945] sm:$0xff] %v944
        %s947 = scalar_lea.vmem %s105, 24 [#allocation0]
        %v948 = vld [vmem:[%s947] sm:$0xff]
        %s949 = scalar_lea.vmem %s113, 24 [#allocation1]
        %v950 = vld [vmem:[%s949] sm:$0xff]
        %v951 = vmul.f32 %v950, %v911
        %952 = vadd.xlane.f32.xlu0 %v951
        %v953 = vpop.xlane.xlu0 %952
        %v954 = vsub.f32 %v948, %v953
        %v955 = vmul.f32 %v954, %v918
        %v956 = vsel %vm909, %v955, 0.0
        %v957 = vadd.f32 %v950, %v956
        %s958 = scalar_lea.vmem %s113, 24 [#allocation1]
        %959 = vst [vmem:[%s958] sm:$0xff] %v957
        %vm960 = vcmask 130168
        %s961 = scalar_lea.vmem %s113, 15 [#allocation1]
        %v962 = vld [vmem:[%s961] ss:$0 sm:$0xff]
        %s963 = scalar_lea.vmem %s105, 15 [#allocation0]
        %v964 = vld [vmem:[%s963] ss:$0 sm:$0xff]
        %v965 = vmul.f32 %v962, %v962
        %966 = vadd.xlane.f32.xlu0 %v965
        %v967 = vpop.xlane.xlu0 %966
        %v968 = vsub.f32 %v964, %v967
        %v969 = vrsqrt.pop %v968
        %s970 = scalar_lea.vmem %s105, 8 [#allocation0]
        %v971 = vld [vmem:[%s970] sm:$0xff]
        %s972 = scalar_lea.vmem %s113, 8 [#allocation1]
        %v973 = vld [vmem:[%s972] sm:$0xff]
        %v974 = vmul.f32 %v973, %v962
        %975 = vadd.xlane.f32.xlu0 %v974
        %v976 = vpop.xlane.xlu0 %975
        %v977 = vsub.f32 %v971, %v976
        %v978 = vmul.f32 %v977, %v969
        %vm979 = vcmask 1047559
        %vm980 = vmand %vm960, %vm979
        %v981 = vsel %vm980, %v978, 0.0
        %v982 = vadd.f32 %v973, %v981
        %s983 = scalar_lea.vmem %s113, 8 [#allocation1]
        %984 = vst [vmem:[%s983] sm:$0xff] %v982
        %s985 = scalar_lea.vmem %s105, 16 [#allocation0]
        %v986 = vld [vmem:[%s985] sm:$0xff]
        %s987 = scalar_lea.vmem %s113, 16 [#allocation1]
        %v988 = vld [vmem:[%s987] sm:$0xff]
        %v989 = vmul.f32 %v988, %v962
        %990 = vadd.xlane.f32.xlu0 %v989
        %v991 = vpop.xlane.xlu0 %990
        %v992 = vsub.f32 %v986, %v991
        %v993 = vmul.f32 %v992, %v969
        %v994 = vsel %vm960, %v993, 0.0
        %v995 = vadd.f32 %v988, %v994
        %s996 = scalar_lea.vmem %s113, 16 [#allocation1]
        %997 = vst [vmem:[%s996] sm:$0xff] %v995
        %s998 = scalar_lea.vmem %s105, 24 [#allocation0]
        %v999 = vld [vmem:[%s998] sm:$0xff]
        %s1000 = scalar_lea.vmem %s113, 24 [#allocation1]
        %v1001 = vld [vmem:[%s1000] sm:$0xff]
        %v1002 = vmul.f32 %v1001, %v962
        %1003 = vadd.xlane.f32.xlu0 %v1002
        %v1004 = vpop.xlane.xlu0 %1003
        %v1005 = vsub.f32 %v999, %v1004
        %v1006 = vmul.f32 %v1005, %v969
        %v1007 = vsel %vm960, %v1006, 0.0
        %v1008 = vadd.f32 %v1001, %v1007
        %s1009 = scalar_lea.vmem %s113, 24 [#allocation1]
        %1010 = vst [vmem:[%s1009] sm:$0xff] %v1008
        %vm1011 = vcmask 138368
        %s1012 = scalar_lea.vmem %s113, 16 [#allocation1]
        %v1013 = vld [vmem:[%s1012] ss:$0 sm:$0xff]
        %s1014 = scalar_lea.vmem %s105, 16 [#allocation0]
        %v1015 = vld [vmem:[%s1014] ss:$0 sm:$0xff]
        %v1016 = vmul.f32 %v1013, %v1013
        %1017 = vadd.xlane.f32.xlu0 %v1016
        %v1018 = vpop.xlane.xlu0 %1017
        %v1019 = vsub.f32 %v1015, %v1018
        %v1020 = vrsqrt.pop %v1019
        %s1021 = scalar_lea.vmem %s105, 16 [#allocation0]
        %v1022 = vld [vmem:[%s1021] sm:$0xff]
        %s1023 = scalar_lea.vmem %s113, 16 [#allocation1]
        %v1024 = vld [vmem:[%s1023] sm:$0xff]
        %v1025 = vmul.f32 %v1024, %v1013
        %1026 = vadd.xlane.f32.xlu0 %v1025
        %v1027 = vpop.xlane.xlu0 %1026
        %v1028 = vsub.f32 %v1022, %v1027
        %v1029 = vmul.f32 %v1028, %v1020
        %v1030 = vsel %vm1011, %v1029, 0.0
        %v1031 = vadd.f32 %v1024, %v1030
        %s1032 = scalar_lea.vmem %s113, 16 [#allocation1]
        %1033 = vst [vmem:[%s1032] sm:$0xff] %v1031
        %s1034 = scalar_lea.vmem %s105, 24 [#allocation0]
        %v1035 = vld [vmem:[%s1034] sm:$0xff]
        %s1036 = scalar_lea.vmem %s113, 24 [#allocation1]
        %v1037 = vld [vmem:[%s1036] sm:$0xff]
        %v1038 = vmul.f32 %v1037, %v1013
        %1039 = vadd.xlane.f32.xlu0 %v1038
        %v1040 = vpop.xlane.xlu0 %1039
        %v1041 = vsub.f32 %v1035, %v1040
        %v1042 = vmul.f32 %v1041, %v1020
        %v1043 = vsel %vm1011, %v1042, 0.0
        %v1044 = vadd.f32 %v1037, %v1043
        %s1045 = scalar_lea.vmem %s113, 24 [#allocation1]
        %1046 = vst [vmem:[%s1045] sm:$0xff] %v1044
        %vm1047 = vcmask 146568
        %s1048 = scalar_lea.vmem %s113, 17 [#allocation1]
        %v1049 = vld [vmem:[%s1048] ss:$0 sm:$0xff]
        %s1050 = scalar_lea.vmem %s105, 17 [#allocation0]
        %v1051 = vld [vmem:[%s1050] ss:$0 sm:$0xff]
        %v1052 = vmul.f32 %v1049, %v1049
        %1053 = vadd.xlane.f32.xlu0 %v1052
        %v1054 = vpop.xlane.xlu0 %1053
        %v1055 = vsub.f32 %v1051, %v1054
        %v1056 = vrsqrt.pop %v1055
        %s1057 = scalar_lea.vmem %s105, 16 [#allocation0]
        %v1058 = vld [vmem:[%s1057] sm:$0xff]
        %s1059 = scalar_lea.vmem %s113, 16 [#allocation1]
        %v1060 = vld [vmem:[%s1059] sm:$0xff]
        %v1061 = vmul.f32 %v1060, %v1049
        %1062 = vadd.xlane.f32.xlu0 %v1061
        %v1063 = vpop.xlane.xlu0 %1062
        %v1064 = vsub.f32 %v1058, %v1063
        %v1065 = vmul.f32 %v1064, %v1056
        %vm1066 = vcmask 1047553
        %vm1067 = vmand %vm1047, %vm1066
        %v1068 = vsel %vm1067, %v1065, 0.0
        %v1069 = vadd.f32 %v1060, %v1068
        %s1070 = scalar_lea.vmem %s113, 16 [#allocation1]
        %1071 = vst [vmem:[%s1070] sm:$0xff] %v1069
        %s1072 = scalar_lea.vmem %s105, 24 [#allocation0]
        %v1073 = vld [vmem:[%s1072] sm:$0xff]
        %s1074 = scalar_lea.vmem %s113, 24 [#allocation1]
        %v1075 = vld [vmem:[%s1074] sm:$0xff]
        %v1076 = vmul.f32 %v1075, %v1049
        %1077 = vadd.xlane.f32.xlu0 %v1076
        %v1078 = vpop.xlane.xlu0 %1077
        %v1079 = vsub.f32 %v1073, %v1078
        %v1080 = vmul.f32 %v1079, %v1056
        %v1081 = vsel %vm1047, %v1080, 0.0
        %v1082 = vadd.f32 %v1075, %v1081
        %s1083 = scalar_lea.vmem %s113, 24 [#allocation1]
        %1084 = vst [vmem:[%s1083] sm:$0xff] %v1082
        %vm1085 = vcmask 154768
        %s1086 = scalar_lea.vmem %s113, 18 [#allocation1]
        %v1087 = vld [vmem:[%s1086] ss:$0 sm:$0xff]
        %s1088 = scalar_lea.vmem %s105, 18 [#allocation0]
        %v1089 = vld [vmem:[%s1088] ss:$0 sm:$0xff]
        %v1090 = vmul.f32 %v1087, %v1087
        %1091 = vadd.xlane.f32.xlu0 %v1090
        %v1092 = vpop.xlane.xlu0 %1091
        %v1093 = vsub.f32 %v1089, %v1092
        %v1094 = vrsqrt.pop %v1093
        %s1095 = scalar_lea.vmem %s105, 16 [#allocation0]
        %v1096 = vld [vmem:[%s1095] sm:$0xff]
        %s1097 = scalar_lea.vmem %s113, 16 [#allocation1]
        %v1098 = vld [vmem:[%s1097] sm:$0xff]
        %v1099 = vmul.f32 %v1098, %v1087
        %1100 = vadd.xlane.f32.xlu0 %v1099
        %v1101 = vpop.xlane.xlu0 %1100
        %v1102 = vsub.f32 %v1096, %v1101
        %v1103 = vmul.f32 %v1102, %v1094
        %vm1104 = vcmask 1047554
        %vm1105 = vmand %vm1085, %vm1104
        %v1106 = vsel %vm1105, %v1103, 0.0
        %v1107 = vadd.f32 %v1098, %v1106
        %s1108 = scalar_lea.vmem %s113, 16 [#allocation1]
        %1109 = vst [vmem:[%s1108] sm:$0xff] %v1107
        %s1110 = scalar_lea.vmem %s105, 24 [#allocation0]
        %v1111 = vld [vmem:[%s1110] sm:$0xff]
        %s1112 = scalar_lea.vmem %s113, 24 [#allocation1]
        %v1113 = vld [vmem:[%s1112] sm:$0xff]
        %v1114 = vmul.f32 %v1113, %v1087
        %1115 = vadd.xlane.f32.xlu0 %v1114
        %v1116 = vpop.xlane.xlu0 %1115
        %v1117 = vsub.f32 %v1111, %v1116
        %v1118 = vmul.f32 %v1117, %v1094
        %v1119 = vsel %vm1085, %v1118, 0.0
        %v1120 = vadd.f32 %v1113, %v1119
        %s1121 = scalar_lea.vmem %s113, 24 [#allocation1]
        %1122 = vst [vmem:[%s1121] sm:$0xff] %v1120
        %vm1123 = vcmask 162968
        %s1124 = scalar_lea.vmem %s113, 19 [#allocation1]
        %v1125 = vld [vmem:[%s1124] ss:$0 sm:$0xff]
        %s1126 = scalar_lea.vmem %s105, 19 [#allocation0]
        %v1127 = vld [vmem:[%s1126] ss:$0 sm:$0xff]
        %v1128 = vmul.f32 %v1125, %v1125
        %1129 = vadd.xlane.f32.xlu0 %v1128
        %v1130 = vpop.xlane.xlu0 %1129
        %v1131 = vsub.f32 %v1127, %v1130
        %v1132 = vrsqrt.pop %v1131
        %s1133 = scalar_lea.vmem %s105, 16 [#allocation0]
        %v1134 = vld [vmem:[%s1133] sm:$0xff]
        %s1135 = scalar_lea.vmem %s113, 16 [#allocation1]
        %v1136 = vld [vmem:[%s1135] sm:$0xff]
        %v1137 = vmul.f32 %v1136, %v1125
        %1138 = vadd.xlane.f32.xlu0 %v1137
        %v1139 = vpop.xlane.xlu0 %1138
        %v1140 = vsub.f32 %v1134, %v1139
        %v1141 = vmul.f32 %v1140, %v1132
        %vm1142 = vcmask 1047555
        %vm1143 = vmand %vm1123, %vm1142
        %v1144 = vsel %vm1143, %v1141, 0.0
        %v1145 = vadd.f32 %v1136, %v1144
        %s1146 = scalar_lea.vmem %s113, 16 [#allocation1]
        %1147 = vst [vmem:[%s1146] sm:$0xff] %v1145
        %s1148 = scalar_lea.vmem %s105, 24 [#allocation0]
        %v1149 = vld [vmem:[%s1148] sm:$0xff]
        %s1150 = scalar_lea.vmem %s113, 24 [#allocation1]
        %v1151 = vld [vmem:[%s1150] sm:$0xff]
        %v1152 = vmul.f32 %v1151, %v1125
        %1153 = vadd.xlane.f32.xlu0 %v1152
        %v1154 = vpop.xlane.xlu0 %1153
        %v1155 = vsub.f32 %v1149, %v1154
        %v1156 = vmul.f32 %v1155, %v1132
        %v1157 = vsel %vm1123, %v1156, 0.0
        %v1158 = vadd.f32 %v1151, %v1157
        %s1159 = scalar_lea.vmem %s113, 24 [#allocation1]
        %1160 = vst [vmem:[%s1159] sm:$0xff] %v1158
        %vm1161 = vcmask 171168
        %s1162 = scalar_lea.vmem %s113, 20 [#allocation1]
        %v1163 = vld [vmem:[%s1162] ss:$0 sm:$0xff]
        %s1164 = scalar_lea.vmem %s105, 20 [#allocation0]
        %v1165 = vld [vmem:[%s1164] ss:$0 sm:$0xff]
        %v1166 = vmul.f32 %v1163, %v1163
        %1167 = vadd.xlane.f32.xlu0 %v1166
        %v1168 = vpop.xlane.xlu0 %1167
        %v1169 = vsub.f32 %v1165, %v1168
        %v1170 = vrsqrt.pop %v1169
        %s1171 = scalar_lea.vmem %s105, 16 [#allocation0]
        %v1172 = vld [vmem:[%s1171] sm:$0xff]
        %s1173 = scalar_lea.vmem %s113, 16 [#allocation1]
        %v1174 = vld [vmem:[%s1173] sm:$0xff]
        %v1175 = vmul.f32 %v1174, %v1163
        %1176 = vadd.xlane.f32.xlu0 %v1175
        %v1177 = vpop.xlane.xlu0 %1176
        %v1178 = vsub.f32 %v1172, %v1177
        %v1179 = vmul.f32 %v1178, %v1170
        %vm1180 = vcmask 1047556
        %vm1181 = vmand %vm1161, %vm1180
        %v1182 = vsel %vm1181, %v1179, 0.0
        %v1183 = vadd.f32 %v1174, %v1182
        %s1184 = scalar_lea.vmem %s113, 16 [#allocation1]
        %1185 = vst [vmem:[%s1184] sm:$0xff] %v1183
        %s1186 = scalar_lea.vmem %s105, 24 [#allocation0]
        %v1187 = vld [vmem:[%s1186] sm:$0xff]
        %s1188 = scalar_lea.vmem %s113, 24 [#allocation1]
        %v1189 = vld [vmem:[%s1188] sm:$0xff]
        %v1190 = vmul.f32 %v1189, %v1163
        %1191 = vadd.xlane.f32.xlu0 %v1190
        %v1192 = vpop.xlane.xlu0 %1191
        %v1193 = vsub.f32 %v1187, %v1192
        %v1194 = vmul.f32 %v1193, %v1170
        %v1195 = vsel %vm1161, %v1194, 0.0
        %v1196 = vadd.f32 %v1189, %v1195
        %s1197 = scalar_lea.vmem %s113, 24 [#allocation1]
        %1198 = vst [vmem:[%s1197] sm:$0xff] %v1196
        %vm1199 = vcmask 179368
        %s1200 = scalar_lea.vmem %s113, 21 [#allocation1]
        %v1201 = vld [vmem:[%s1200] ss:$0 sm:$0xff]
        %s1202 = scalar_lea.vmem %s105, 21 [#allocation0]
        %v1203 = vld [vmem:[%s1202] ss:$0 sm:$0xff]
        %v1204 = vmul.f32 %v1201, %v1201
        %1205 = vadd.xlane.f32.xlu0 %v1204
        %v1206 = vpop.xlane.xlu0 %1205
        %v1207 = vsub.f32 %v1203, %v1206
        %v1208 = vrsqrt.pop %v1207
        %s1209 = scalar_lea.vmem %s105, 16 [#allocation0]
        %v1210 = vld [vmem:[%s1209] sm:$0xff]
        %s1211 = scalar_lea.vmem %s113, 16 [#allocation1]
        %v1212 = vld [vmem:[%s1211] sm:$0xff]
        %v1213 = vmul.f32 %v1212, %v1201
        %1214 = vadd.xlane.f32.xlu0 %v1213
        %v1215 = vpop.xlane.xlu0 %1214
        %v1216 = vsub.f32 %v1210, %v1215
        %v1217 = vmul.f32 %v1216, %v1208
        %vm1218 = vcmask 1047557
        %vm1219 = vmand %vm1199, %vm1218
        %v1220 = vsel %vm1219, %v1217, 0.0
        %v1221 = vadd.f32 %v1212, %v1220
        %s1222 = scalar_lea.vmem %s113, 16 [#allocation1]
        %1223 = vst [vmem:[%s1222] sm:$0xff] %v1221
        %s1224 = scalar_lea.vmem %s105, 24 [#allocation0]
        %v1225 = vld [vmem:[%s1224] sm:$0xff]
        %s1226 = scalar_lea.vmem %s113, 24 [#allocation1]
        %v1227 = vld [vmem:[%s1226] sm:$0xff]
        %v1228 = vmul.f32 %v1227, %v1201
        %1229 = vadd.xlane.f32.xlu0 %v1228
        %v1230 = vpop.xlane.xlu0 %1229
        %v1231 = vsub.f32 %v1225, %v1230
        %v1232 = vmul.f32 %v1231, %v1208
        %v1233 = vsel %vm1199, %v1232, 0.0
        %v1234 = vadd.f32 %v1227, %v1233
        %s1235 = scalar_lea.vmem %s113, 24 [#allocation1]
        %1236 = vst [vmem:[%s1235] sm:$0xff] %v1234
        %vm1237 = vcmask 187568
        %s1238 = scalar_lea.vmem %s113, 22 [#allocation1]
        %v1239 = vld [vmem:[%s1238] ss:$0 sm:$0xff]
        %s1240 = scalar_lea.vmem %s105, 22 [#allocation0]
        %v1241 = vld [vmem:[%s1240] ss:$0 sm:$0xff]
        %v1242 = vmul.f32 %v1239, %v1239
        %1243 = vadd.xlane.f32.xlu0 %v1242
        %v1244 = vpop.xlane.xlu0 %1243
        %v1245 = vsub.f32 %v1241, %v1244
        %v1246 = vrsqrt.pop %v1245
        %s1247 = scalar_lea.vmem %s105, 16 [#allocation0]
        %v1248 = vld [vmem:[%s1247] sm:$0xff]
        %s1249 = scalar_lea.vmem %s113, 16 [#allocation1]
        %v1250 = vld [vmem:[%s1249] sm:$0xff]
        %v1251 = vmul.f32 %v1250, %v1239
        %1252 = vadd.xlane.f32.xlu0 %v1251
        %v1253 = vpop.xlane.xlu0 %1252
        %v1254 = vsub.f32 %v1248, %v1253
        %v1255 = vmul.f32 %v1254, %v1246
        %vm1256 = vcmask 1047558
        %vm1257 = vmand %vm1237, %vm1256
        %v1258 = vsel %vm1257, %v1255, 0.0
        %v1259 = vadd.f32 %v1250, %v1258
        %s1260 = scalar_lea.vmem %s113, 16 [#allocation1]
        %1261 = vst [vmem:[%s1260] sm:$0xff] %v1259
        %s1262 = scalar_lea.vmem %s105, 24 [#allocation0]
        %v1263 = vld [vmem:[%s1262] sm:$0xff]
        %s1264 = scalar_lea.vmem %s113, 24 [#allocation1]
        %v1265 = vld [vmem:[%s1264] sm:$0xff]
        %v1266 = vmul.f32 %v1265, %v1239
        %1267 = vadd.xlane.f32.xlu0 %v1266
        %v1268 = vpop.xlane.xlu0 %1267
        %v1269 = vsub.f32 %v1263, %v1268
        %v1270 = vmul.f32 %v1269, %v1246
        %v1271 = vsel %vm1237, %v1270, 0.0
        %v1272 = vadd.f32 %v1265, %v1271
        %s1273 = scalar_lea.vmem %s113, 24 [#allocation1]
        %1274 = vst [vmem:[%s1273] sm:$0xff] %v1272
        %vm1275 = vcmask 195768
        %s1276 = scalar_lea.vmem %s113, 23 [#allocation1]
        %v1277 = vld [vmem:[%s1276] ss:$0 sm:$0xff]
        %s1278 = scalar_lea.vmem %s105, 23 [#allocation0]
        %v1279 = vld [vmem:[%s1278] ss:$0 sm:$0xff]
        %v1280 = vmul.f32 %v1277, %v1277
        %1281 = vadd.xlane.f32.xlu0 %v1280
        %v1282 = vpop.xlane.xlu0 %1281
        %v1283 = vsub.f32 %v1279, %v1282
        %v1284 = vrsqrt.pop %v1283
        %s1285 = scalar_lea.vmem %s105, 16 [#allocation0]
        %v1286 = vld [vmem:[%s1285] sm:$0xff]
        %s1287 = scalar_lea.vmem %s113, 16 [#allocation1]
        %v1288 = vld [vmem:[%s1287] sm:$0xff]
        %v1289 = vmul.f32 %v1288, %v1277
        %1290 = vadd.xlane.f32.xlu0 %v1289
        %v1291 = vpop.xlane.xlu0 %1290
        %v1292 = vsub.f32 %v1286, %v1291
        %v1293 = vmul.f32 %v1292, %v1284
        %vm1294 = vcmask 1047559
        %vm1295 = vmand %vm1275, %vm1294
        %v1296 = vsel %vm1295, %v1293, 0.0
        %v1297 = vadd.f32 %v1288, %v1296
        %s1298 = scalar_lea.vmem %s113, 16 [#allocation1]
        %1299 = vst [vmem:[%s1298] sm:$0xff] %v1297
        %s1300 = scalar_lea.vmem %s105, 24 [#allocation0]
        %v1301 = vld [vmem:[%s1300] sm:$0xff]
        %s1302 = scalar_lea.vmem %s113, 24 [#allocation1]
        %v1303 = vld [vmem:[%s1302] sm:$0xff]
        %v1304 = vmul.f32 %v1303, %v1277
        %1305 = vadd.xlane.f32.xlu0 %v1304
        %v1306 = vpop.xlane.xlu0 %1305
        %v1307 = vsub.f32 %v1301, %v1306
        %v1308 = vmul.f32 %v1307, %v1284
        %v1309 = vsel %vm1275, %v1308, 0.0
        %v1310 = vadd.f32 %v1303, %v1309
        %s1311 = scalar_lea.vmem %s113, 24 [#allocation1]
        %1312 = vst [vmem:[%s1311] sm:$0xff] %v1310
        %vm1313 = vcmask 203968
        %s1314 = scalar_lea.vmem %s113, 24 [#allocation1]
        %v1315 = vld [vmem:[%s1314] ss:$0 sm:$0xff]
        %s1316 = scalar_lea.vmem %s105, 24 [#allocation0]
        %v1317 = vld [vmem:[%s1316] ss:$0 sm:$0xff]
        %v1318 = vmul.f32 %v1315, %v1315
        %1319 = vadd.xlane.f32.xlu0 %v1318
        %v1320 = vpop.xlane.xlu0 %1319
        %v1321 = vsub.f32 %v1317, %v1320
        %v1322 = vrsqrt.pop %v1321
        %s1323 = scalar_lea.vmem %s105, 24 [#allocation0]
        %v1324 = vld [vmem:[%s1323] sm:$0xff]
        %s1325 = scalar_lea.vmem %s113, 24 [#allocation1]
        %v1326 = vld [vmem:[%s1325] sm:$0xff]
        %v1327 = vmul.f32 %v1326, %v1315
        %1328 = vadd.xlane.f32.xlu0 %v1327
        %v1329 = vpop.xlane.xlu0 %1328
        %v1330 = vsub.f32 %v1324, %v1329
        %v1331 = vmul.f32 %v1330, %v1322
        %v1332 = vsel %vm1313, %v1331, 0.0
        %v1333 = vadd.f32 %v1326, %v1332
        %s1334 = scalar_lea.vmem %s113, 24 [#allocation1]
        %1335 = vst [vmem:[%s1334] sm:$0xff] %v1333
        %vm1336 = vcmask 212168
        %s1337 = scalar_lea.vmem %s113, 25 [#allocation1]
        %v1338 = vld [vmem:[%s1337] ss:$0 sm:$0xff]
        %s1339 = scalar_lea.vmem %s105, 25 [#allocation0]
        %v1340 = vld [vmem:[%s1339] ss:$0 sm:$0xff]
        %v1341 = vmul.f32 %v1338, %v1338
        %1342 = vadd.xlane.f32.xlu0 %v1341
        %v1343 = vpop.xlane.xlu0 %1342
        %v1344 = vsub.f32 %v1340, %v1343
        %v1345 = vrsqrt.pop %v1344
        %s1346 = scalar_lea.vmem %s105, 24 [#allocation0]
        %v1347 = vld [vmem:[%s1346] sm:$0xff]
        %s1348 = scalar_lea.vmem %s113, 24 [#allocation1]
        %v1349 = vld [vmem:[%s1348] sm:$0xff]
        %v1350 = vmul.f32 %v1349, %v1338
        %1351 = vadd.xlane.f32.xlu0 %v1350
        %v1352 = vpop.xlane.xlu0 %1351
        %v1353 = vsub.f32 %v1347, %v1352
        %v1354 = vmul.f32 %v1353, %v1345
        %vm1355 = vcmask 1047553
        %vm1356 = vmand %vm1336, %vm1355
        %v1357 = vsel %vm1356, %v1354, 0.0
        %v1358 = vadd.f32 %v1349, %v1357
        %s1359 = scalar_lea.vmem %s113, 24 [#allocation1]
        %1360 = vst [vmem:[%s1359] sm:$0xff] %v1358
        %vm1361 = vcmask 220368
        %s1362 = scalar_lea.vmem %s113, 26 [#allocation1]
        %v1363 = vld [vmem:[%s1362] ss:$0 sm:$0xff]
        %s1364 = scalar_lea.vmem %s105, 26 [#allocation0]
        %v1365 = vld [vmem:[%s1364] ss:$0 sm:$0xff]
        %v1366 = vmul.f32 %v1363, %v1363
        %1367 = vadd.xlane.f32.xlu0 %v1366
        %v1368 = vpop.xlane.xlu0 %1367
        %v1369 = vsub.f32 %v1365, %v1368
        %v1370 = vrsqrt.pop %v1369
        %s1371 = scalar_lea.vmem %s105, 24 [#allocation0]
        %v1372 = vld [vmem:[%s1371] sm:$0xff]
        %s1373 = scalar_lea.vmem %s113, 24 [#allocation1]
        %v1374 = vld [vmem:[%s1373] sm:$0xff]
        %v1375 = vmul.f32 %v1374, %v1363
        %1376 = vadd.xlane.f32.xlu0 %v1375
        %v1377 = vpop.xlane.xlu0 %1376
        %v1378 = vsub.f32 %v1372, %v1377
        %v1379 = vmul.f32 %v1378, %v1370
        %vm1380 = vcmask 1047554
        %vm1381 = vmand %vm1361, %vm1380
        %v1382 = vsel %vm1381, %v1379, 0.0
        %v1383 = vadd.f32 %v1374, %v1382
        %s1384 = scalar_lea.vmem %s113, 24 [#allocation1]
        %1385 = vst [vmem:[%s1384] sm:$0xff] %v1383
        %vm1386 = vcmask 228568
        %s1387 = scalar_lea.vmem %s113, 27 [#allocation1]
        %v1388 = vld [vmem:[%s1387] ss:$0 sm:$0xff]
        %s1389 = scalar_lea.vmem %s105, 27 [#allocation0]
        %v1390 = vld [vmem:[%s1389] ss:$0 sm:$0xff]
        %v1391 = vmul.f32 %v1388, %v1388
        %1392 = vadd.xlane.f32.xlu0 %v1391
        %v1393 = vpop.xlane.xlu0 %1392
        %v1394 = vsub.f32 %v1390, %v1393
        %v1395 = vrsqrt.pop %v1394
        %s1396 = scalar_lea.vmem %s105, 24 [#allocation0]
        %v1397 = vld [vmem:[%s1396] sm:$0xff]
        %s1398 = scalar_lea.vmem %s113, 24 [#allocation1]
        %v1399 = vld [vmem:[%s1398] sm:$0xff]
        %v1400 = vmul.f32 %v1399, %v1388
        %1401 = vadd.xlane.f32.xlu0 %v1400
        %v1402 = vpop.xlane.xlu0 %1401
        %v1403 = vsub.f32 %v1397, %v1402
        %v1404 = vmul.f32 %v1403, %v1395
        %vm1405 = vcmask 1047555
        %vm1406 = vmand %vm1386, %vm1405
        %v1407 = vsel %vm1406, %v1404, 0.0
        %v1408 = vadd.f32 %v1399, %v1407
        %s1409 = scalar_lea.vmem %s113, 24 [#allocation1]
        %1410 = vst [vmem:[%s1409] sm:$0xff] %v1408
        %vm1411 = vcmask 236768
        %s1412 = scalar_lea.vmem %s113, 28 [#allocation1]
        %v1413 = vld [vmem:[%s1412] ss:$0 sm:$0xff]
        %s1414 = scalar_lea.vmem %s105, 28 [#allocation0]
        %v1415 = vld [vmem:[%s1414] ss:$0 sm:$0xff]
        %v1416 = vmul.f32 %v1413, %v1413
        %1417 = vadd.xlane.f32.xlu0 %v1416
        %v1418 = vpop.xlane.xlu0 %1417
        %v1419 = vsub.f32 %v1415, %v1418
        %v1420 = vrsqrt.pop %v1419
        %s1421 = scalar_lea.vmem %s105, 24 [#allocation0]
        %v1422 = vld [vmem:[%s1421] sm:$0xff]
        %s1423 = scalar_lea.vmem %s113, 24 [#allocation1]
        %v1424 = vld [vmem:[%s1423] sm:$0xff]
        %v1425 = vmul.f32 %v1424, %v1413
        %1426 = vadd.xlane.f32.xlu0 %v1425
        %v1427 = vpop.xlane.xlu0 %1426
        %v1428 = vsub.f32 %v1422, %v1427
        %v1429 = vmul.f32 %v1428, %v1420
        %vm1430 = vcmask 1047556
        %vm1431 = vmand %vm1411, %vm1430
        %v1432 = vsel %vm1431, %v1429, 0.0
        %v1433 = vadd.f32 %v1424, %v1432
        %s1434 = scalar_lea.vmem %s113, 24 [#allocation1]
        %1435 = vst [vmem:[%s1434] sm:$0xff] %v1433
        %vm1436 = vcmask 244968
        %s1437 = scalar_lea.vmem %s113, 29 [#allocation1]
        %v1438 = vld [vmem:[%s1437] ss:$0 sm:$0xff]
        %s1439 = scalar_lea.vmem %s105, 29 [#allocation0]
        %v1440 = vld [vmem:[%s1439] ss:$0 sm:$0xff]
        %v1441 = vmul.f32 %v1438, %v1438
        %1442 = vadd.xlane.f32.xlu0 %v1441
        %v1443 = vpop.xlane.xlu0 %1442
        %v1444 = vsub.f32 %v1440, %v1443
        %v1445 = vrsqrt.pop %v1444
        %s1446 = scalar_lea.vmem %s105, 24 [#allocation0]
        %v1447 = vld [vmem:[%s1446] sm:$0xff]
        %s1448 = scalar_lea.vmem %s113, 24 [#allocation1]
        %v1449 = vld [vmem:[%s1448] sm:$0xff]
        %v1450 = vmul.f32 %v1449, %v1438
        %1451 = vadd.xlane.f32.xlu0 %v1450
        %v1452 = vpop.xlane.xlu0 %1451
        %v1453 = vsub.f32 %v1447, %v1452
        %v1454 = vmul.f32 %v1453, %v1445
        %vm1455 = vcmask 1047557
        %vm1456 = vmand %vm1436, %vm1455
        %v1457 = vsel %vm1456, %v1454, 0.0
        %v1458 = vadd.f32 %v1449, %v1457
        %s1459 = scalar_lea.vmem %s113, 24 [#allocation1]
        %1460 = vst [vmem:[%s1459] sm:$0xff] %v1458
        %vm1461 = vcmask 253168
        %s1462 = scalar_lea.vmem %s113, 30 [#allocation1]
        %v1463 = vld [vmem:[%s1462] ss:$0 sm:$0xff]
        %s1464 = scalar_lea.vmem %s105, 30 [#allocation0]
        %v1465 = vld [vmem:[%s1464] ss:$0 sm:$0xff]
        %v1466 = vmul.f32 %v1463, %v1463
        %1467 = vadd.xlane.f32.xlu0 %v1466
        %v1468 = vpop.xlane.xlu0 %1467
        %v1469 = vsub.f32 %v1465, %v1468
        %v1470 = vrsqrt.pop %v1469
        %s1471 = scalar_lea.vmem %s105, 24 [#allocation0]
        %v1472 = vld [vmem:[%s1471] sm:$0xff]
        %s1473 = scalar_lea.vmem %s113, 24 [#allocation1]
        %v1474 = vld [vmem:[%s1473] sm:$0xff]
        %v1475 = vmul.f32 %v1474, %v1463
        %1476 = vadd.xlane.f32.xlu0 %v1475
        %v1477 = vpop.xlane.xlu0 %1476
        %v1478 = vsub.f32 %v1472, %v1477
        %v1479 = vmul.f32 %v1478, %v1470
        %vm1480 = vcmask 1047558
        %vm1481 = vmand %vm1461, %vm1480
        %v1482 = vsel %vm1481, %v1479, 0.0
        %v1483 = vadd.f32 %v1474, %v1482
        %s1484 = scalar_lea.vmem %s113, 24 [#allocation1]
        %1485 = vst [vmem:[%s1484] sm:$0xff] %v1483
        %vm1486 = vcmask 261368
        %s1487 = scalar_lea.vmem %s113, 31 [#allocation1]
        %v1488 = vld [vmem:[%s1487] ss:$0 sm:$0xff]
        %s1489 = scalar_lea.vmem %s105, 31 [#allocation0]
        %v1490 = vld [vmem:[%s1489] ss:$0 sm:$0xff]
        %v1491 = vmul.f32 %v1488, %v1488
        %1492 = vadd.xlane.f32.xlu0 %v1491
        %v1493 = vpop.xlane.xlu0 %1492
        %v1494 = vsub.f32 %v1490, %v1493
        %v1495 = vrsqrt.pop %v1494
        %s1496 = scalar_lea.vmem %s105, 24 [#allocation0]
        %v1497 = vld [vmem:[%s1496] sm:$0xff]
        %s1498 = scalar_lea.vmem %s113, 24 [#allocation1]
        %v1499 = vld [vmem:[%s1498] sm:$0xff]
        %v1500 = vmul.f32 %v1499, %v1488
        %1501 = vadd.xlane.f32.xlu0 %v1500
        %v1502 = vpop.xlane.xlu0 %1501
        %v1503 = vsub.f32 %v1497, %v1502
        %v1504 = vmul.f32 %v1503, %v1495
        %vm1505 = vcmask 1047559
        %vm1506 = vmand %vm1486, %vm1505
        %v1507 = vsel %vm1506, %v1504, 0.0
        %v1508 = vadd.f32 %v1499, %v1507
        %s1509 = scalar_lea.vmem %s113, 24 [#allocation1]
        %1510 = vst [vmem:[%s1509] sm:$0xff] %v1508
        %s1511 = sand.u32 %s8, 1
        %s1512 = sand.u32 %s8, 1
        %s1513 = smul.addr %s1512, 32
        %s1514 = scalar_lea.vmem [#allocation1], %s1513
        %s1515 = sadd.s32 %s15, %s14
        %s1516 = smul.addr %s13, 4
        %s1517 = sadd.s32 %s1515, %s1516
        %s1518 = smul.addr %s1517, 8
        %s1519 = scalar_lea.vmem %s1, %s1518
        // Predicated region
        $region55: #{custom-call.2} parent=53 // pred_check
          _
        $region56: #{custom-call.2} parent=53 // pred_check_branch
          %1521 = sbr.rel (0) target = $region58
        $region57: #{custom-call.2} parent=53 // pred_region
          // Predicated region
          $region59: #{custom-call.2} parent=57 // pred_check
            _
          $region60: #{custom-call.2} parent=57 // pred_check_branch
            %1523 = sbr.rel (0) target = $region62
          $region61: #{custom-call.2} parent=57 // pred_region
            // Predicated region
            $region74: #{custom-call.2} parent=61 // pred_check
              _
            $region75: #{custom-call.2} parent=61 // pred_check_branch
              %1545 = sbr.rel (0) target = $region77
            $region76: #{custom-call.2} parent=61 // pred_region
              loop: start=0, step=1, limit=1
              $region78: #{custom-call.2} parent=76 // loop_pre_header
                _
              $region79: #{custom-call.2} parent=76 // loop_header
                %s1547 = sphi 0, %s1551
                %p1548 = scmp.ge.s32.totalorder %s1547, 1
                %s1552 = sphi %s1514, %s1514
                %s1553 = sphi %s1519, %s1519
              $region80: #{custom-call.2} parent=76 // loop_header_branch
                %1550 = sbr.rel (%p1548) target = $region84
              $region81: #{custom-call.2} parent=76 // loop_body
                %v1554 = vld [vmem:[%s1552] sm:$0xff]
                %1555 = vst [vmem:[%s1553] sm:$0xff] %v1554
                %v1556 = vld [vmem:[%s1552 + $0x8] sm:$0xff]
                %1557 = vst [vmem:[%s1553 + $0x8] sm:$0xff] %v1556
                %v1558 = vld [vmem:[%s1552 + $0x10] sm:$0xff]
                %1559 = vst [vmem:[%s1553 + $0x10] sm:$0xff] %v1558
                %v1560 = vld [vmem:[%s1552 + $0x18] sm:$0xff]
                %1561 = vst [vmem:[%s1553 + $0x18] sm:$0xff] %v1560
              $region82: #{custom-call.2} parent=76 // loop_footer
                %s1551 = sadd.s32 1, %s1547
              $region83: #{custom-call.2} parent=76 // loop_footer_branch
                %1546 = sbr.rel target = $region79
              $region84: #{custom-call.2} parent=76 // loop_exit
                _
            $region77: #{custom-call.2} parent=61 // pred_fallthru
              _
            // Predicated region
            $region85: #{custom-call.2} parent=61 // pred_check
              _
            $region86: #{custom-call.2} parent=61 // pred_check_branch
              %1563 = sbr.rel target = $region88
            $region87: #{custom-call.2} parent=61 // pred_region
              _
            $region88: #{custom-call.2} parent=61 // pred_fallthru
              _
          $region62: #{custom-call.2} parent=57 // pred_fallthru
            _
          // Predicated region
          $region63: #{custom-call.2} parent=57 // pred_check
            _
          $region64: #{custom-call.2} parent=57 // pred_check_branch
            %1525 = sbr.rel target = $region66
          $region65: #{custom-call.2} parent=57 // pred_region
            %s1527 = ssub.s32 256, 1
            loop: start=0, step=1, limit=1
            $region67: #{custom-call.2} parent=65 // loop_pre_header
              _
            $region68: #{custom-call.2} parent=65 // loop_header
              %s1529 = sphi 0, %s1533
              %p1530 = scmp.ge.s32.totalorder %s1529, 1
              %s1534 = sphi %s1514, %s1514
              %s1535 = sphi %s1519, %s1519
            $region69: #{custom-call.2} parent=65 // loop_header_branch
              %1532 = sbr.rel (%p1530) target = $region73
            $region70: #{custom-call.2} parent=65 // loop_body
              %v1536 = vld [vmem:[%s1534] sm:%s1527]
              %1537 = vst [vmem:[%s1535] sm:%s1527] %v1536
              %v1538 = vld [vmem:[%s1534 + $0x8] sm:%s1527]
              %1539 = vst [vmem:[%s1535 + $0x8] sm:%s1527] %v1538
              %v1540 = vld [vmem:[%s1534 + $0x10] sm:%s1527]
              %1541 = vst [vmem:[%s1535 + $0x10] sm:%s1527] %v1540
              %v1542 = vld [vmem:[%s1534 + $0x18] sm:%s1527]
              %1543 = vst [vmem:[%s1535 + $0x18] sm:%s1527] %v1542
            $region71: #{custom-call.2} parent=65 // loop_footer
              %s1533 = sadd.s32 1, %s1529
            $region72: #{custom-call.2} parent=65 // loop_footer_branch
              %1528 = sbr.rel target = $region68
            $region73: #{custom-call.2} parent=65 // loop_exit
              _
          $region66: #{custom-call.2} parent=57 // pred_fallthru
            _
        $region58: #{custom-call.2} parent=53 // pred_fallthru
          _
        %1564 = vnop
      $region54: #{custom-call.2} parent=5 // pred_fallthru
        _
      %p1565 = scmp.le.s32.totalorder 2, %s3
      // Predicated region
      $region89: #{custom-call.2} parent=5 // pred_check
        %p1566 = pneg %p1565
      $region90: #{custom-call.2} parent=5 // pred_check_branch
        %1568 = sbr.rel (%p1566) target = $region92
      $region91: #{custom-call.2} parent=5 // pred_region
        %s1569 = ssub.s32 %s3, 2
        %s1570 = sand.u32 %s9, 1
        %s1571 = sand.u32 %s9, 1
        %s1572 = smul.addr %s1571, 32
        %s1573 = scalar_lea.vmem [#allocation1], %s1572
      $region92: #{custom-call.2} parent=5 // pred_fallthru
        _
    $region6: #{custom-call.2} parent=1 // loop_footer
      %s7 = sadd.s32 1, %s3
    $region7: #{custom-call.2} parent=1 // loop_footer_branch
      %2 = sbr.rel target = $region3
    $region8: #{custom-call.2} parent=1 // loop_exit
      _

// kernel: mcr2_forward.1
$region0: #{mcr2_forward.1}
  #allocation0 [shape = 'u32[]', space=smem, size = 0x4, offset = 0x4, fixed_abs, tag = 'smem constant byte address 0x4 - core index']
  #allocation1 [shape = 'u32[144,128]{1,0:T(1,128)}', space=vmem, size = 0x12000, scoped, tag = 'internal scratch']
  %s0 = inlined_call_operand.vmem [shape: bf16[32,128], index: 0, kind: input, shape index: {}]
  %s1 = inlined_call_operand.vmem [shape: bf16[5,128], index: 1, kind: input, shape index: {}]
  %s2 = inlined_call_operand.vmem [shape: f32[5,32,32], index: 2, kind: output, shape index: {}]
  %s3 = sld [smem:[#allocation0]]
  $region22: #{mcr2_forward.1} parent=0
    _
  %s5 = ssub.s32 1, %s3
  %s6 = scalar_select 0, %s5, %s3
  // Predicated region
  $region2: #{mcr2_forward.1} parent=0 // pred_check
    _
  $region3: #{mcr2_forward.1} parent=0 // pred_check_branch
    %8 = sbr.rel (0) target = $region5
  $region4: #{mcr2_forward.1} parent=0 // pred_region
    _
  $region5: #{mcr2_forward.1} parent=0 // pred_fallthru
    _
  // Predicated region
  $region6: #{mcr2_forward.1} parent=0 // pred_check
    _
  $region7: #{mcr2_forward.1} parent=0 // pred_check_branch
    %10 = sbr.rel (0) target = $region9
  $region8: #{mcr2_forward.1} parent=0 // pred_region
    _
  $region9: #{mcr2_forward.1} parent=0 // pred_fallthru
    _
  %p12 = scmp.eq.s32.totalorder 0, 0
  // Predicated region
  $region10: #{mcr2_forward.1} parent=0 // pred_check
    %p13 = pneg %p12
  $region11: #{mcr2_forward.1} parent=0 // pred_check_branch
    %15 = sbr.rel (%p13) target = $region13
  $region12: #{mcr2_forward.1} parent=0 // pred_region
    %v16 = vlaneseq
    %v17 = vshrl.u32 %v16, 7
    %v18 = vadd.s32 %v17, 8
    %v19 = vadd.s32 %v17, 16
    %v20 = vadd.s32 %v17, 24
    %v21 = vlaneseq
    %v22 = vand.u32 %v21, 127
    %vm23 = vcmp.eq.s32.totalorder %v17, %v22
    %vm24 = vcmp.eq.s32.totalorder %v18, %v22
    %vm25 = vcmp.eq.s32.totalorder %v19, %v22
    %vm26 = vcmp.eq.s32.totalorder %v20, %v22
    %v27 = vsel %vm23, 1, 0
    %v28 = vsel %vm24, 1, 0
    %v29 = vsel %vm25, 1, 0
    %v30 = vsel %vm26, 1, 0
    %v31 = vcvt.s32.f32 %v27
    %v32 = vcvt.s32.f32 %v28
    %v33 = vcvt.s32.f32 %v29
    %v34 = vcvt.s32.f32 %v30
    %vm35 = vcmask 261120
    %36 = vst.msk [vmem:[%s2] sm:$0xff] %vm35, %v31
    %37 = vst.msk [vmem:[%s2 + $0x8] sm:$0xff] %vm35, %v32
    %38 = vst.msk [vmem:[%s2 + $0x10] sm:$0xff] %vm35, %v33
    %39 = vst.msk [vmem:[%s2 + $0x18] sm:$0xff] %vm35, %v34
    %40 = vst.msk [vmem:[%s2 + $0x20] sm:$0xff] %vm35, %v31
    %41 = vst.msk [vmem:[%s2 + $0x28] sm:$0xff] %vm35, %v32
    %42 = vst.msk [vmem:[%s2 + $0x30] sm:$0xff] %vm35, %v33
    %43 = vst.msk [vmem:[%s2 + $0x38] sm:$0xff] %vm35, %v34
    %44 = vst.msk [vmem:[%s2 + $0x40] sm:$0xff] %vm35, %v31
    %45 = vst.msk [vmem:[%s2 + $0x48] sm:$0xff] %vm35, %v32
    %46 = vst.msk [vmem:[%s2 + $0x50] sm:$0xff] %vm35, %v33
    %47 = vst.msk [vmem:[%s2 + $0x58] sm:$0xff] %vm35, %v34
    %48 = vst.msk [vmem:[%s2 + $0x60] sm:$0xff] %vm35, %v31
    %49 = vst.msk [vmem:[%s2 + $0x68] sm:$0xff] %vm35, %v32
    %50 = vst.msk [vmem:[%s2 + $0x70] sm:$0xff] %vm35, %v33
    %51 = vst.msk [vmem:[%s2 + $0x78] sm:$0xff] %vm35, %v34
    %52 = vst.msk [vmem:[%s2 + $0x80] sm:$0xff] %vm35, %v31
    %53 = vst.msk [vmem:[%s2 + $0x88] sm:$0xff] %vm35, %v32
    %54 = vst.msk [vmem:[%s2 + $0x90] sm:$0xff] %vm35, %v33
    %55 = vst.msk [vmem:[%s2 + $0x98] sm:$0xff] %vm35, %v34
  $region13: #{mcr2_forward.1} parent=0 // pred_fallthru
    _
  %v56 = vld [vmem:[%s0] sm:$0xf]
  %v57 = vld [vmem:[%s0 + $0x4] sm:$0xf]
  %v58 = vld [vmem:[%s0 + $0x8] sm:$0xf]
  %v59 = vld [vmem:[%s0 + $0xc] sm:$0xf]
  %v60 = vld [vmem:[%s1] sm:$0x7]
  %v63 = vunpack.c.l.s4 1966171168
  %v64 = vunpack.c.0.s8 %v63
  %v65 = vlaneseq
  %v66 = vshrl.u32 %v65, 7
  %v67 = vsub.s32 %v64, %v66
  %v68 = vrot.slane %v60, %v67
  %v69 = vcombine.high %v68, %v68
  %v71 = vunpack.c.l.s4 1966171168
  %v72 = vunpack.c.0.s8 %v71
  %v73 = vlaneseq
  %v74 = vshrl.u32 %v73, 7
  %v75 = vsub.s32 %v72, %v74
  %v76 = vrot.slane %v68, %v75
  %v78 = vunpack.c.l.s4 1966171168
  %v79 = vunpack.c.0.s8 %v78
  %v80 = vlaneseq
  %v81 = vshrl.u32 %v80, 7
  %v82 = vsub.s32 %v79, %v81
  %v83 = vrot.slane %v69, %v82
  %v84 = vcombine.high %v76, %v76
  %v85 = vunpack.i.l.s16 %v76
  %v86 = vunpack.i.h.s16 %v76
  %v87 = vunpack.i.l.s16 %v83
  %v88 = vunpack.i.h.s16 %v83
  %v89 = vunpack.i.l.s16 %v84
  %v90 = vpack.i.b16 %v85, %v85
  %v91 = vpack.i.b16 %v86, %v86
  %v92 = vpack.i.b16 %v87, %v87
  %v93 = vpack.i.b16 %v88, %v88
  %v94 = vpack.i.b16 %v89, %v89
  %v95 = vlaneseq
  %v96 = vshrl.u32 %v95, 7
  %v97 = vsub.s32 0, %v96
  %v98 = vrot.slane %v90, %v97
  %v99 = vlaneseq
  %v100 = vshrl.u32 %v99, 7
  %v101 = vsub.s32 0, %v100
  %v102 = vrot.slane %v91, %v101
  %v103 = vlaneseq
  %v104 = vshrl.u32 %v103, 7
  %v105 = vsub.s32 0, %v104
  %v106 = vrot.slane %v92, %v105
  %v107 = vlaneseq
  %v108 = vshrl.u32 %v107, 7
  %v109 = vsub.s32 0, %v108
  %v110 = vrot.slane %v93, %v109
  %v111 = vlaneseq
  %v112 = vshrl.u32 %v111, 7
  %v113 = vsub.s32 0, %v112
  %v114 = vrot.slane %v94, %v113
  %v116 = vpack.i.b16 %v98, %v98
  %v118 = vlaneseq
  %v119 = vshrl.u32 %v118, 7
  %v120 = vsub.s32 0, %v119
  %v121 = vrot.slane %v116, %v120
  %v123 = vpack.i.b16 %v102, %v102
  %v125 = vlaneseq
  %v126 = vshrl.u32 %v125, 7
  %v127 = vsub.s32 0, %v126
  %v128 = vrot.slane %v123, %v127
  %v130 = vpack.i.b16 %v106, %v106
  %v132 = vlaneseq
  %v133 = vshrl.u32 %v132, 7
  %v134 = vsub.s32 0, %v133
  %v135 = vrot.slane %v130, %v134
  %v137 = vpack.i.b16 %v110, %v110
  %v139 = vlaneseq
  %v140 = vshrl.u32 %v139, 7
  %v141 = vsub.s32 0, %v140
  %v142 = vrot.slane %v137, %v141
  %v144 = vpack.i.b16 %v114, %v114
  %v146 = vlaneseq
  %v147 = vshrl.u32 %v146, 7
  %v148 = vsub.s32 0, %v147
  %v149 = vrot.slane %v144, %v148
  %v154 = vunpack.c.l.b16 %v56
  %v155 = vunpack.c.l.b16 %v57
  %v156 = vunpack.c.l.b16 %v58
  %v157 = vunpack.c.l.b16 %v59
  %v158 = vpack.c.b16 %v155, %v154
  %v159 = vpack.c.b16 %v157, %v156
  %v162 = vmul.bf16 %v121, %v158
  %v163 = vmul.bf16 %v121, %v159
  %v164 = vmul.bf16 %v128, %v158
  %v165 = vmul.bf16 %v128, %v159
  %v166 = vmul.bf16 %v135, %v158
  %v167 = vmul.bf16 %v135, %v159
  %v168 = vmul.bf16 %v142, %v158
  %v169 = vmul.bf16 %v142, %v159
  %v170 = vmul.bf16 %v149, %v158
  %v171 = vmul.bf16 %v149, %v159
  %172 = vmatprep.subr.bf16.mxu0 0
  %173 = vmatpush1.bf16.xpose.msra.mxu0 0
  %174 = vmatprep.subr.bf16.mxu0 0
  %175 = vmatpush1.bf16.xpose.msra.mxu0 0
  %176 = vmatprep.subr.bf16.mxu0 0
  %177 = vmatpush1.bf16.xpose.msra.mxu0 0
  %178 = vmatprep.subr.bf16.mxu0 0
  %179 = vmatpush1.bf16.xpose.msra.mxu0 0
  %180 = vmatprep.subr.bf16.mxu0 0
  %181 = vmatpush1.bf16.xpose.msra.mxu0 0
  %182 = vmatprep.subr.bf16.mxu0 0
  %183 = vmatpush1.bf16.xpose.msra.mxu0 0
  %184 = vmatprep.subr.bf16.mxu0 0
  %185 = vmatpush1.bf16.xpose.msra.mxu0 %v159
  %186 = vmatprep.subr.bf16.mxu0 0
  %187 = vmatpush1.bf16.xpose.msra.mxu0 %v158
  %188 = vmatprep.subr.bf16.mxu0 0
  %189 = vmatpush2.bf16.xpose.msra.mxu0 0
  %190 = vmatprep.subr.bf16.mxu0 0
  %191 = vmatpush2.bf16.xpose.msra.mxu0 0
  %192 = vmatprep.subr.bf16.mxu0 0
  %193 = vmatpush2.bf16.xpose.msra.mxu0 0
  %194 = vmatprep.subr.bf16.mxu0 0
  %195 = vmatpush2.bf16.xpose.msra.mxu0 0
  %196 = vmatprep.subr.bf16.mxu0 0
  %197 = vmatpush2.bf16.xpose.msra.mxu0 0
  %198 = vmatprep.subr.bf16.mxu0 0
  %199 = vmatpush2.bf16.xpose.msra.mxu0 0
  %200 = vmatprep.subr.bf16.mxu0 0
  %201 = vmatpush2.bf16.xpose.msra.mxu0 0
  %202 = vmatprep.subr.bf16.mxu0 0
  %203 = vmatpush2.bf16.xpose.msra.mxu0 0
  %204 = vmatprep.mubr.bf16.mxu0 0
  %205 = vmatmul.mubr.bf16.gmra.mxu0 %v162
  %v206 = vpop.f32.mrf.mxu0
  %v207 = vadd.f32 0.0, %v206
  %v208 = vpop.f32.mrf.mxu0
  %v209 = vpop.f32.mrf.mxu0
  %v210 = vadd.f32 0.0, %v209
  %v211 = vpop.f32.mrf.mxu0
  %212 = vmatprep.mubr.bf16.mxu0 0
  %213 = vmatmul.mubr.bf16.gmra.mxu0 %v163
  %v214 = vpop.f32.mrf.mxu0
  %v215 = vadd.f32 0.0, %v214
  %v216 = vpop.f32.mrf.mxu0
  %v217 = vpop.f32.mrf.mxu0
  %v218 = vadd.f32 0.0, %v217
  %v219 = vpop.f32.mrf.mxu0
  %220 = vmatprep.mubr.bf16.mxu0 0
  %221 = vmatmul.mubr.bf16.gmra.mxu0 %v164
  %v222 = vpop.f32.mrf.mxu0
  %v223 = vadd.f32 0.0, %v222
  %v224 = vpop.f32.mrf.mxu0
  %v225 = vpop.f32.mrf.mxu0
  %v226 = vadd.f32 0.0, %v225
  %v227 = vpop.f32.mrf.mxu0
  %228 = vmatprep.mubr.bf16.mxu0 0
  %229 = vmatmul.mubr.bf16.gmra.mxu0 %v165
  %v230 = vpop.f32.mrf.mxu0
  %v231 = vadd.f32 0.0, %v230
  %v232 = vpop.f32.mrf.mxu0
  %v233 = vpop.f32.mrf.mxu0
  %v234 = vadd.f32 0.0, %v233
  %v235 = vpop.f32.mrf.mxu0
  %236 = vmatprep.mubr.bf16.mxu0 0
  %237 = vmatmul.mubr.bf16.gmra.mxu0 %v166
  %v238 = vpop.f32.mrf.mxu0
  %v239 = vadd.f32 0.0, %v238
  %v240 = vpop.f32.mrf.mxu0
  %v241 = vpop.f32.mrf.mxu0
  %v242 = vadd.f32 0.0, %v241
  %v243 = vpop.f32.mrf.mxu0
  %244 = vmatprep.mubr.bf16.mxu0 0
  %245 = vmatmul.mubr.bf16.gmra.mxu0 %v167
  %v246 = vpop.f32.mrf.mxu0
  %v247 = vadd.f32 0.0, %v246
  %v248 = vpop.f32.mrf.mxu0
  %v249 = vpop.f32.mrf.mxu0
  %v250 = vadd.f32 0.0, %v249
  %v251 = vpop.f32.mrf.mxu0
  %252 = vmatprep.mubr.bf16.mxu0 0
  %253 = vmatmul.mubr.bf16.gmra.mxu0 %v168
  %v254 = vpop.f32.mrf.mxu0
  %v255 = vadd.f32 0.0, %v254
  %v256 = vpop.f32.mrf.mxu0
  %v257 = vpop.f32.mrf.mxu0
  %v258 = vadd.f32 0.0, %v257
  %v259 = vpop.f32.mrf.mxu0
  %260 = vmatprep.mubr.bf16.mxu0 0
  %261 = vmatmul.mubr.bf16.gmra.mxu0 %v169
  %v262 = vpop.f32.mrf.mxu0
  %v263 = vadd.f32 0.0, %v262
  %v264 = vpop.f32.mrf.mxu0
  %v265 = vpop.f32.mrf.mxu0
  %v266 = vadd.f32 0.0, %v265
  %v267 = vpop.f32.mrf.mxu0
  %268 = vmatprep.mubr.bf16.mxu0 0
  %269 = vmatmul.mubr.bf16.gmra.mxu0 %v170
  %v270 = vpop.f32.mrf.mxu0
  %v271 = vadd.f32 0.0, %v270
  %v272 = vpop.f32.mrf.mxu0
  %v273 = vpop.f32.mrf.mxu0
  %v274 = vadd.f32 0.0, %v273
  %v275 = vpop.f32.mrf.mxu0
  %276 = vmatprep.mubr.bf16.mxu0 0
  %277 = vmatmul.mubr.bf16.gmra.mxu0 %v171
  %v278 = vpop.f32.mrf.mxu0
  %v279 = vadd.f32 0.0, %v278
  %v280 = vpop.f32.mrf.mxu0
  %v281 = vpop.f32.mrf.mxu0
  %v282 = vadd.f32 0.0, %v281
  %v283 = vpop.f32.mrf.mxu0
  %284 = vdwg.mxu0
  %v285 = vld [vmem:[%s2] sm:$0xff]
  %v286 = vld [vmem:[%s2 + $0x8] sm:$0xff]
  %v287 = vld [vmem:[%s2 + $0x10] sm:$0xff]
  %v288 = vld [vmem:[%s2 + $0x18] sm:$0xff]
  %v289 = vld [vmem:[%s2 + $0x20] sm:$0xff]
  %v290 = vld [vmem:[%s2 + $0x28] sm:$0xff]
  %v291 = vld [vmem:[%s2 + $0x30] sm:$0xff]
  %v292 = vld [vmem:[%s2 + $0x38] sm:$0xff]
  %v293 = vld [vmem:[%s2 + $0x40] sm:$0xff]
  %v294 = vld [vmem:[%s2 + $0x48] sm:$0xff]
  %v295 = vld [vmem:[%s2 + $0x50] sm:$0xff]
  %v296 = vld [vmem:[%s2 + $0x58] sm:$0xff]
  %v297 = vld [vmem:[%s2 + $0x60] sm:$0xff]
  %v298 = vld [vmem:[%s2 + $0x68] sm:$0xff]
  %v299 = vld [vmem:[%s2 + $0x70] sm:$0xff]
  %v300 = vld [vmem:[%s2 + $0x78] sm:$0xff]
  %v301 = vld [vmem:[%s2 + $0x80] sm:$0xff]
  %v302 = vld [vmem:[%s2 + $0x88] sm:$0xff]
  %v303 = vld [vmem:[%s2 + $0x90] sm:$0xff]
  %v304 = vld [vmem:[%s2 + $0x98] sm:$0xff]
  %v305 = vadd.f32 %v285, %v207
  %v306 = vadd.f32 %v286, %v210
  %v307 = vadd.f32 %v287, %v215
  %v308 = vadd.f32 %v288, %v218
  %v309 = vadd.f32 %v289, %v223
  %v310 = vadd.f32 %v290, %v226
  %v311 = vadd.f32 %v291, %v231
  %v312 = vadd.f32 %v292, %v234
  %v313 = vadd.f32 %v293, %v239
  %v314 = vadd.f32 %v294, %v242
  %v315 = vadd.f32 %v295, %v247
  %v316 = vadd.f32 %v296, %v250
  %v317 = vadd.f32 %v297, %v255
  %v318 = vadd.f32 %v298, %v258
  %v319 = vadd.f32 %v299, %v263
  %v320 = vadd.f32 %v300, %v266
  %v321 = vadd.f32 %v301, %v271
  %v322 = vadd.f32 %v302, %v274
  %v323 = vadd.f32 %v303, %v279
  %v324 = vadd.f32 %v304, %v282
  %vm325 = vcmask 261120
  %326 = vst.msk [vmem:[%s2] sm:$0xff] %vm325, %v305
  %327 = vst.msk [vmem:[%s2 + $0x8] sm:$0xff] %vm325, %v306
  %328 = vst.msk [vmem:[%s2 + $0x10] sm:$0xff] %vm325, %v307
  %329 = vst.msk [vmem:[%s2 + $0x18] sm:$0xff] %vm325, %v308
  %330 = vst.msk [vmem:[%s2 + $0x20] sm:$0xff] %vm325, %v309
  %331 = vst.msk [vmem:[%s2 + $0x28] sm:$0xff] %vm325, %v310
  %332 = vst.msk [vmem:[%s2 + $0x30] sm:$0xff] %vm325, %v311
  %333 = vst.msk [vmem:[%s2 + $0x38] sm:$0xff] %vm325, %v312
  %334 = vst.msk [vmem:[%s2 + $0x40] sm:$0xff] %vm325, %v313
  %335 = vst.msk [vmem:[%s2 + $0x48] sm:$0xff] %vm325, %v314
  %336 = vst.msk [vmem:[%s2 + $0x50] sm:$0xff] %vm325, %v315
  %337 = vst.msk [vmem:[%s2 + $0x58] sm:$0xff] %vm325, %v316
  %338 = vst.msk [vmem:[%s2 + $0x60] sm:$0xff] %vm325, %v317
  %339 = vst.msk [vmem:[%s2 + $0x68] sm:$0xff] %vm325, %v318
  %340 = vst.msk [vmem:[%s2 + $0x70] sm:$0xff] %vm325, %v319
  %341 = vst.msk [vmem:[%s2 + $0x78] sm:$0xff] %vm325, %v320
  %342 = vst.msk [vmem:[%s2 + $0x80] sm:$0xff] %vm325, %v321
  %343 = vst.msk [vmem:[%s2 + $0x88] sm:$0xff] %vm325, %v322
  %344 = vst.msk [vmem:[%s2 + $0x90] sm:$0xff] %vm325, %v323
  %345 = vst.msk [vmem:[%s2 + $0x98] sm:$0xff] %vm325, %v324
  // Predicated region
  $region14: #{mcr2_forward.1} parent=0 // pred_check
    _
  $region15: #{mcr2_forward.1} parent=0 // pred_check_branch
    %347 = sbr.rel (0) target = $region17
  $region16: #{mcr2_forward.1} parent=0 // pred_region
    _
  $region17: #{mcr2_forward.1} parent=0 // pred_fallthru
    _
  // Predicated region
  $region18: #{mcr2_forward.1} parent=0 // pred_check
    _
  $region19: #{mcr2_forward.1} parent=0 // pred_check_branch
    %349 = sbr.rel (0) target = $region21
  $region20: #{mcr2_forward.1} parent=0 // pred_region
    _
  $region21: #{mcr2_forward.1} parent=0 // pred_fallthru
    _

</llo_original>
